<compile_context>
chip_gen: v5e
topology: v5e:2x2
jax: 0.10.0
libtpu: 0.0.40
codegen_flags: <defaults>
</compile_context>

<pallas_src>
import functools

import jax
import jax.numpy as jnp
from jax.experimental import pallas as pl
from jax.experimental.pallas import tpu as pltpu


def _fused_lstm_kernel(obs_ref, w_ih1_ref, b1_ref, w_hh_ref, w_ih_ref, b_ref,
                       out_ref, h_scr, c_scr, gx_scr, hs_scr,
                       *, compute_dtype, step_unroll):
    """All LSTM layers, one (batch-block, time-chunk) tile per grid step.

    obs_ref : (BB, TT, D)          observation chunk (original dtype)
    w_ih1_ref: (D, 4H)  cd         layer-1 input->gates weights (transposed)
    b1_ref  : (1, 4H)   f32        layer-1 combined bias
    w_hh_ref: (L, H, 4H) cd        hidden->gates weights (transposed), all layers
    w_ih_ref: (max(L-1,1), H, 4H)  input->gates weights for layers 2..L
    b_ref   : (max(L-1,1), 1, 4H)  combined biases for layers 2..L
    out_ref : (BB, TT, H)          top-layer hidden states for this chunk
    h_scr/c_scr: (L, BB, H) f32    recurrent state, persists across time chunks
    gx_scr  : (BB, TT, 4H) f32     current layer's input-side gate projections
    hs_scr  : (BB, TT, H)  f32     current layer's per-step hidden outputs
    """
    t = pl.program_id(1)

    @pl.when(t == 0)
    def _():
        h_scr[...] = jnp.zeros_like(h_scr)
        c_scr[...] = jnp.zeros_like(c_scr)

    L, BB, H = h_scr.shape
    TT = out_ref.shape[1]
    D = obs_ref.shape[2]
    cd = compute_dtype
    f32 = jnp.float32

    # Layer-1 input projection: one chunk-wide (BB*TT, D) x (D, 4H) MXU matmul
    # straight from the DMA'd observation chunk (no gx1 HBM round trip).
    x = obs_ref[...].astype(cd).reshape(BB * TT, D)
    gx_scr[...] = (jnp.dot(x, w_ih1_ref[...], preferred_element_type=f32)
                   + b1_ref[...]).reshape(BB, TT, 4 * H)

    for l in range(L):
        w_hh_l = w_hh_ref[l]                       # (H, 4H), compute dtype
        h = h_scr[l]                               # (BB, H) f32
        c = c_scr[l]                               # (BB, H) f32

        def step(s, carry):
            h, c = carry
            # Per-step read of only this step's gate rows (no whole-chunk vreg load).
            gx_s = gx_scr[:, pl.ds(s, 1), :].reshape(BB, 4 * H)
            gates = gx_s + jnp.dot(h.astype(cd), w_hh_l,
                                   preferred_element_type=f32)
            # NOTE: at H < 128 these gate slices are sub-vreg lane extracts; at
            # production H (multiple of 128) they fall on lane boundaries.
            i = jax.nn.sigmoid(gates[:, 0 * H:1 * H])
            f = jax.nn.sigmoid(gates[:, 1 * H:2 * H])
            g = jnp.tanh(gates[:, 2 * H:3 * H])
            o = jax.nn.sigmoid(gates[:, 3 * H:4 * H])
            c = f * c + i * g
            h = o * jnp.tanh(c)
            # Per-step scratch write bounds the live range (no hs list).
            hs_scr[:, pl.ds(s, 1), :] = h.reshape(BB, 1, H)
            return h, c

        if TT <= 16:
            # Short chunk: full static unroll (state is tiny; no list kept live).
            for s in range(TT):
                h, c = step(s, (h, c))
        else:
            # Long chunk: bounded unroll keeps scheduler visibility without
            # exploding the schedule / vreg live ranges.
            h, c = jax.lax.fori_loop(0, TT, step, (h, c), unroll=step_unroll)

        h_scr[l] = h
        c_scr[l] = c

        if l + 1 < L:
            # Next layer's input projection: one chunk-wide matmul reading the
            # hidden-state scratch directly (stays entirely in VMEM).
            hs = hs_scr[...].reshape(BB * TT, H).astype(cd)
            gx_scr[...] = (jnp.dot(hs, w_ih_ref[l], preferred_element_type=f32)
                           + b_ref[l]).reshape(BB, TT, 4 * H)
        else:
            # One dense (BB, TT, H) store for the whole chunk.
            out_ref[...] = hs_scr[...].astype(out_ref.dtype)


def _choose_chunk(T, max_chunk=32):
    """Pick time-chunk TT and padded length Tp satisfying TPU block rules:
    the chunk is either the whole (padded) sequence or a multiple of 8."""
    max_chunk = max(8, int(max_chunk))   # guard: avoid tt == 0 (div-by-zero)
    if T <= max_chunk:
        return T, T
    for tt in range(max_chunk - max_chunk % 8, 0, -8):
        if T % tt == 0:
            return tt, T
    tt = max_chunk - max_chunk % 8
    return tt, -(-T // tt) * tt


def summarizer_forward(observations, params, *, max_chunk=32, batch_blocks=1,
                       compute_dtype=jnp.bfloat16, step_unroll=8):
    """Equivalent of Summarizer.forward(observations) with hidden=None.

    observations: (B, T, input_dim), batch_first like nn.LSTM(batch_first=True).
    params: list of per-layer dicts with 'w_ih' (4H, D_in), 'w_hh' (4H, H),
            'b_ih' (4H,), 'b_hh' (4H,)  -- PyTorch parameter shapes.
    batch_blocks: number of batch tiles -> leading "parallel" grid axis.  Use 2
            on v7x (2 TensorCores/chip); keep 1 on v5e/v6e.
    compute_dtype: matmul operand dtype (f32 accumulation).  bf16 halves weight
            DMA/VMEM and doubles MXU rate; use jnp.float32 for exact validation.
    max_chunk: timesteps per grid step.  Sweep up to 64 on v5e/v6e (128 MiB
            VMEM); keep <= 32 on v7x (64 MiB VMEM).
    Returns summary: (B, T, H).
    """
    B, T, D = observations.shape
    L = len(params)
    H = params[0]["w_hh"].shape[1]
    f32 = jnp.float32
    cd = compute_dtype

    assert B % batch_blocks == 0, (B, batch_blocks)
    BB = B // batch_blocks

    # Weight / bias prep (transposed for x @ W; bf16 weights, f32 biases).
    w_ih1 = params[0]["w_ih"].T.astype(cd)                                  # (D, 4H)
    b1 = (params[0]["b_ih"] + params[0]["b_hh"]).astype(f32).reshape(1, 4 * H)
    w_hh = jnp.stack([p["w_hh"].T for p in params], axis=0).astype(cd)      # (L, H, 4H)
    if L > 1:
        w_ih_rest = jnp.stack([params[l]["w_ih"].T for l in range(1, L)],
                              axis=0).astype(cd)                            # (L-1, H, 4H)
        b_rest = jnp.stack(
            [(params[l]["b_ih"] + params[l]["b_hh"]).reshape(1, 4 * H)
             for l in range(1, L)], axis=0).astype(f32)                     # (L-1, 1, 4H)
    else:
        w_ih_rest = jnp.zeros((1, H, 4 * H), cd)    # unused when L == 1
        b_rest = jnp.zeros((1, 1, 4 * H), f32)
    Lw = w_ih_rest.shape[0]

    TT, Tp = _choose_chunk(T, max_chunk)
    obs = observations
    if Tp != T:
        # Zero-padded tail steps only touch discarded output rows.
        obs = jnp.pad(obs, ((0, 0), (0, Tp - T), (0, 0)))

    # Explicit VMEM budget: double-buffered obs/out blocks + (double-buffered)
    # grid-invariant weights + scratch, with generous margin.
    in_sz = jnp.dtype(observations.dtype).itemsize
    cd_sz = jnp.dtype(cd).itemsize
    block_bytes = 2 * BB * TT * (D + H) * in_sz
    weight_bytes = (2 * cd_sz * (D * 4 * H + L * H * 4 * H + Lw * H * 4 * H)
                    + 2 * 4 * (4 * H + Lw * 4 * H))
    scratch_bytes = 4 * (2 * L * BB * H + BB * TT * 4 * H + BB * TT * H)
    vmem_limit = int(1.5 * (block_bytes + weight_bytes + scratch_bytes)) + (8 << 20)
    # TODO(synk): on v7x additionally mark the grid-invariant weight specs
    # pipeline_mode=pl.Buffered(1) to drop the second (never re-DMA'd) buffer.

    kernel = functools.partial(_fused_lstm_kernel, compute_dtype=cd,
                               step_unroll=step_unroll)

    out = pl.pallas_call(
        kernel,
        out_shape=jax.ShapeDtypeStruct((B, Tp, H), observations.dtype),
        grid_spec=pltpu.PrefetchScalarGridSpec(
            num_scalar_prefetch=0,
            grid=(batch_blocks, Tp // TT),            # (batch tiles, time chunks)
            in_specs=[
                pl.BlockSpec((BB, TT, D), lambda b, t: (b, t, 0)),       # obs chunk
                pl.BlockSpec((D, 4 * H), lambda b, t: (0, 0)),           # W_ih layer 1
                pl.BlockSpec((1, 4 * H), lambda b, t: (0, 0)),           # bias layer 1
                pl.BlockSpec((L, H, 4 * H), lambda b, t: (0, 0, 0)),     # W_hh all layers
                pl.BlockSpec((Lw, H, 4 * H), lambda b, t: (0, 0, 0)),    # W_ih layers 2..L
                pl.BlockSpec((Lw, 1, 4 * H), lambda b, t: (0, 0, 0)),    # biases layers 2..L
            ],
            out_specs=pl.BlockSpec((BB, TT, H), lambda b, t: (b, t, 0)),
            scratch_shapes=[
                pltpu.VMEM((L, BB, H), jnp.float32),      # h state, all layers
                pltpu.VMEM((L, BB, H), jnp.float32),      # c state, all layers
                pltpu.VMEM((BB, TT, 4 * H), jnp.float32),  # current layer gate inputs
                pltpu.VMEM((BB, TT, H), jnp.float32),      # current layer hidden chunk
            ],
        ),
        compiler_params=pltpu.CompilerParams(
            dimension_semantics=("parallel", "arbitrary"),  # batch ∥, time = recurrence
            vmem_limit_bytes=vmem_limit,
        ),
    )(obs, w_ih1, b1, w_hh, w_ih_rest, b_rest)

    if Tp != T:
        out = out[:, :T, :]
    # TODO(synk): return_hidden=True path — final (h_n, c_n) live in h_scr/c_scr
    # but are not exported; padded tail steps would also need masking before
    # exporting them.  Only `summary` is returned (the module's default call).
    return out


def _reference_lstm(observations, params, compute_dtype=jnp.float32):
    """Pure-JAX reference (PyTorch LSTM semantics, gate order i,f,g,o)."""
    x = jnp.transpose(observations, (1, 0, 2)).astype(jnp.float32)  # (T, B, D)
    cd = compute_dtype
    for layer in params:
        w_ih_t = layer["w_ih"].T.astype(cd)
        w_hh_t = layer["w_hh"].T.astype(cd)
        b = (layer["b_ih"] + layer["b_hh"]).astype(jnp.float32)
        B = x.shape[1]
        H = layer["w_hh"].shape[1]

        def step(carry, x_t):
            h, c = carry
            gates = (jnp.dot(x_t.astype(cd), w_ih_t, preferred_element_type=jnp.float32)
                     + jnp.dot(h.astype(cd), w_hh_t, preferred_element_type=jnp.float32)
                     + b)
            i = jax.nn.sigmoid(gates[:, 0 * H:1 * H])
            f = jax.nn.sigmoid(gates[:, 1 * H:2 * H])
            g = jnp.tanh(gates[:, 2 * H:3 * H])
            o = jax.nn.sigmoid(gates[:, 3 * H:4 * H])
            c = f * c + i * g
            h = o * jnp.tanh(c)
            return (h, c), h

        init = (jnp.zeros((B, H), jnp.float32), jnp.zeros((B, H), jnp.float32))
        _, x = jax.lax.scan(step, init, x)
    return jnp.transpose(x, (1, 0, 2))


def make_params(key, input_dim, hidden_dim, num_layers=2, dtype=jnp.float32):
    """Deterministic init matching PyTorch LSTM parameter shapes
    (uniform(-1/sqrt(H), 1/sqrt(H)))."""
    params = []
    bound = 1.0 / jnp.sqrt(jnp.float32(hidden_dim))
    for layer in range(num_layers):
        d_in = input_dim if layer == 0 else hidden_dim
        key, k1, k2, k3, k4 = jax.random.split(key, 5)
        params.append({
            "w_ih": jax.random.uniform(k1, (4 * hidden_dim, d_in), dtype, -bound, bound),
            "w_hh": jax.random.uniform(k2, (4 * hidden_dim, hidden_dim), dtype, -bound, bound),
            "b_ih": jax.random.uniform(k3, (4 * hidden_dim,), dtype, -bound, bound),
            "b_hh": jax.random.uniform(k4, (4 * hidden_dim,), dtype, -bound, bound),
        })
    return params


def _run_check(key, B, T, D, H, L, *, compute_dtype, batch_blocks=1,
               max_chunk=32, atol):
    k_obs, k_par = jax.random.split(key)
    obs = jax.random.normal(k_obs, (B, T, D), jnp.float32)
    params = make_params(k_par, D, H, L)
    fwd = jax.jit(functools.partial(
        summarizer_forward, params=params, max_chunk=max_chunk,
        batch_blocks=batch_blocks, compute_dtype=compute_dtype))
    out = jax.block_until_ready(fwd(obs))
    assert out.shape == (B, T, H), out.shape
    ref = _reference_lstm(obs, params, compute_dtype=compute_dtype)
    err = float(jnp.max(jnp.abs(out.astype(jnp.float32) - ref)))
    assert err <= atol, (B, T, D, H, L, str(compute_dtype), err)


if __name__ == "__main__":
    key = jax.random.PRNGKey(0)
    keys = jax.random.split(key, 4)

    # Default module config: batch=2, seq=8, input_dim=32, hidden=32, 2 layers (bf16 compute).
    _run_check(keys[0], 2, 8, 32, 32, 2, compute_dtype=jnp.bfloat16, atol=5e-3)
    # Same config, exact f32 compute (tight numerical validation).
    _run_check(keys[1], 2, 8, 32, 32, 2, compute_dtype=jnp.float32, atol=3e-5)
    # Long sequence: multi-chunk grid, time padding, fori_loop step path (TT=32).
    _run_check(keys[2], 2, 52, 40, 32, 3, compute_dtype=jnp.float32, atol=1e-4)
    # Batch-parallel grid axis (v7x megacore path), bf16 compute.
    _run_check(keys[3], 16, 16, 32, 32, 2, compute_dtype=jnp.bfloat16,
               batch_blocks=2, atol=5e-3)

    print("KERNEL_OK")
</pallas_src>

<mosaic_0001>
module attributes {stable_mosaic.version = 11 : i64} {
  func.func @_fused_lstm_kernel(%arg0: i32, %arg1: i32, %arg2: memref<2x8x32xf32, #tpu.memory_space<vmem>>, %arg3: memref<32x128xbf16, #tpu.memory_space<vmem>>, %arg4: memref<1x128xf32, #tpu.memory_space<vmem>>, %arg5: memref<2x32x128xbf16, #tpu.memory_space<vmem>>, %arg6: memref<1x32x128xbf16, #tpu.memory_space<vmem>>, %arg7: memref<1x1x128xf32, #tpu.memory_space<vmem>>, %arg8: memref<2x8x32xf32, #tpu.memory_space<vmem>>, %arg9: memref<2x2x32xf32, #tpu.memory_space<vmem>>, %arg10: memref<2x2x32xf32, #tpu.memory_space<vmem>>, %arg11: memref<2x8x128xf32, #tpu.memory_space<vmem>>, %arg12: memref<2x8x32xf32, #tpu.memory_space<vmem>>) attributes {dimension_semantics = [#tpu.dimension_semantics<parallel>, #tpu.dimension_semantics<arbitrary>], iteration_bounds = array<i64: 1, 1>, scalar_prefetch = 0 : i64, scratch_operands = 4 : i64, tpu.core_type = #tpu.core_type<tc>, window_params = [{transform_indices = @transform_0, window_bounds = array<i64: 2, 8, 32>}, {pipeline_mode = #tpu.pipeline_mode<synchronous>, transform_indices = @transform_1, window_bounds = array<i64: 32, 128>}, {pipeline_mode = #tpu.pipeline_mode<synchronous>, transform_indices = @transform_2, window_bounds = array<i64: 1, 128>}, {pipeline_mode = #tpu.pipeline_mode<synchronous>, transform_indices = @transform_3, window_bounds = array<i64: 2, 32, 128>}, {pipeline_mode = #tpu.pipeline_mode<synchronous>, transform_indices = @transform_4, window_bounds = array<i64: 1, 32, 128>}, {pipeline_mode = #tpu.pipeline_mode<synchronous>, transform_indices = @transform_5, window_bounds = array<i64: 1, 1, 128>}, {transform_indices = @transform_6, window_bounds = array<i64: 2, 8, 32>}]} {
    %c0_i32 = arith.constant 0 : i32
    %0 = arith.cmpi eq, %arg1, %c0_i32 : i32
    %1 = arith.extui %0 : i1 to i32
    %c0_i32_0 = arith.constant 0 : i32
    %2 = arith.cmpi ne, %1, %c0_i32_0 : i32
    scf.if %2 {
      %cst_212 = arith.constant 0.000000e+00 : f32
      %563 = vector.broadcast %cst_212 : f32 to vector<2x2x32xf32>
      %c0_213 = arith.constant 0 : index
      %c0_214 = arith.constant 0 : index
      %c0_215 = arith.constant 0 : index
      %564 = vector.load %arg9[%c0_213, %c0_214, %c0_215] : memref<2x2x32xf32, #tpu.memory_space<vmem>>, vector<2x2x32xf32>
      tpu.vector_store %arg9[%c0_213, %c0_214, %c0_215], %563 {strides = array<i32>} : memref<2x2x32xf32, #tpu.memory_space<vmem>>, vector<2x2x32xf32>,
      %cst_216 = arith.constant 0.000000e+00 : f32
      %565 = vector.broadcast %cst_216 : f32 to vector<2x2x32xf32>
      %c0_217 = arith.constant 0 : index
      %c0_218 = arith.constant 0 : index
      %c0_219 = arith.constant 0 : index
      %566 = vector.load %arg10[%c0_217, %c0_218, %c0_219] : memref<2x2x32xf32, #tpu.memory_space<vmem>>, vector<2x2x32xf32>
      tpu.vector_store %arg10[%c0_217, %c0_218, %c0_219], %565 {strides = array<i32>} : memref<2x2x32xf32, #tpu.memory_space<vmem>>, vector<2x2x32xf32>,
    } else {
    }
    %c0 = arith.constant 0 : index
    %c0_1 = arith.constant 0 : index
    %c0_2 = arith.constant 0 : index
    %3 = vector.load %arg2[%c0, %c0_1, %c0_2] : memref<2x8x32xf32, #tpu.memory_space<vmem>>, vector<2x8x32xf32>
    %4 = arith.truncf %3 : vector<2x8x32xf32> to vector<2x8x32xbf16>
    %5 = vector.shape_cast %4 : vector<2x8x32xbf16> to vector<16x32xbf16>
    %c0_3 = arith.constant 0 : index
    %c0_4 = arith.constant 0 : index
    %6 = vector.load %arg3[%c0_3, %c0_4] : memref<32x128xbf16, #tpu.memory_space<vmem>>, vector<32x128xbf16>
    %cst = arith.constant dense<0.000000e+00> : vector<16x128xf32>
    %7 = tpu.matmul %5, %6, %cst {dimension_numbers = #tpu.dot_dimension_numbers<[1], [0], [0], [1], [0, 0, 1, 1], [], []>} : vector<16x32xbf16>, vector<32x128xbf16>, vector<16x128xf32> -> vector<16x128xf32>
    %c0_5 = arith.constant 0 : index
    %c0_6 = arith.constant 0 : index
    %8 = vector.load %arg4[%c0_5, %c0_6] : memref<1x128xf32, #tpu.memory_space<vmem>>, vector<1x128xf32>
    %9 = vector.broadcast %8 : vector<1x128xf32> to vector<16x128xf32>
    %10 = arith.addf %7, %9 : vector<16x128xf32>
    %11 = vector.shape_cast %10 : vector<16x128xf32> to vector<2x8x128xf32>
    %c0_7 = arith.constant 0 : index
    %c0_8 = arith.constant 0 : index
    %c0_9 = arith.constant 0 : index
    %12 = vector.load %arg11[%c0_7, %c0_8, %c0_9] : memref<2x8x128xf32, #tpu.memory_space<vmem>>, vector<2x8x128xf32>
    tpu.vector_store %arg11[%c0_7, %c0_8, %c0_9], %11 {strides = array<i32>} : memref<2x8x128xf32, #tpu.memory_space<vmem>>, vector<2x8x128xf32>,
    %c0_10 = arith.constant 0 : index
    %c0_11 = arith.constant 0 : index
    %c0_12 = arith.constant 0 : index
    %13 = vector.load %arg5[%c0_10, %c0_11, %c0_12] : memref<2x32x128xbf16, #tpu.memory_space<vmem>>, vector<1x32x128xbf16>
    %14 = vector.shape_cast %13 : vector<1x32x128xbf16> to vector<32x128xbf16>
    %c0_13 = arith.constant 0 : index
    %c0_14 = arith.constant 0 : index
    %c0_15 = arith.constant 0 : index
    %15 = vector.load %arg9[%c0_13, %c0_14, %c0_15] : memref<2x2x32xf32, #tpu.memory_space<vmem>>, vector<1x2x32xf32>
    %16 = vector.shape_cast %15 : vector<1x2x32xf32> to vector<2x32xf32>
    %c0_16 = arith.constant 0 : index
    %c0_17 = arith.constant 0 : index
    %c0_18 = arith.constant 0 : index
    %17 = vector.load %arg10[%c0_16, %c0_17, %c0_18] : memref<2x2x32xf32, #tpu.memory_space<vmem>>, vector<1x2x32xf32>
    %18 = vector.shape_cast %17 : vector<1x2x32xf32> to vector<2x32xf32>
    %c0_19 = arith.constant 0 : index
    %c0_20 = arith.constant 0 : index
    %c0_21 = arith.constant 0 : index
    %19 = vector.load %arg11[%c0_19, %c0_20, %c0_21] : memref<2x8x128xf32, #tpu.memory_space<vmem>>, vector<2x1x128xf32>
    %20 = vector.shape_cast %19 : vector<2x1x128xf32> to vector<2x128xf32>
    %21 = arith.truncf %16 : vector<2x32xf32> to vector<2x32xbf16>
    %cst_22 = arith.constant dense<0.000000e+00> : vector<2x128xf32>
    %22 = tpu.matmul %21, %14, %cst_22 {dimension_numbers = #tpu.dot_dimension_numbers<[1], [0], [0], [1], [0, 0, 1, 1], [], []>} : vector<2x32xbf16>, vector<32x128xbf16>, vector<2x128xf32> -> vector<2x128xf32>
    %23 = arith.addf %20, %22 : vector<2x128xf32>
    %24 = vector.extract_strided_slice %23 {offsets = [0, 0], sizes = [2, 32], strides = [1, 1]} : vector<2x128xf32> to vector<2x32xf32>
    %25 = arith.negf %24 : vector<2x32xf32>
    %26 = math.exp %25 : vector<2x32xf32>
    %cst_23 = arith.constant 1.000000e+00 : f32
    %27 = vector.broadcast %cst_23 : f32 to vector<2x32xf32>
    %28 = arith.addf %27, %26 : vector<2x32xf32>
    %29 = arith.divf %27, %28 : vector<2x32xf32>
    %30 = vector.extract_strided_slice %23 {offsets = [0, 32], sizes = [2, 32], strides = [1, 1]} : vector<2x128xf32> to vector<2x32xf32>
    %31 = arith.negf %30 : vector<2x32xf32>
    %32 = math.exp %31 : vector<2x32xf32>
    %cst_24 = arith.constant 1.000000e+00 : f32
    %33 = vector.broadcast %cst_24 : f32 to vector<2x32xf32>
    %34 = arith.addf %33, %32 : vector<2x32xf32>
    %35 = arith.divf %33, %34 : vector<2x32xf32>
    %36 = vector.extract_strided_slice %23 {offsets = [0, 64], sizes = [2, 32], strides = [1, 1]} : vector<2x128xf32> to vector<2x32xf32>
    %37 = math.tanh %36 : vector<2x32xf32>
    %38 = vector.extract_strided_slice %23 {offsets = [0, 96], sizes = [2, 32], strides = [1, 1]} : vector<2x128xf32> to vector<2x32xf32>
    %39 = arith.negf %38 : vector<2x32xf32>
    %40 = math.exp %39 : vector<2x32xf32>
    %cst_25 = arith.constant 1.000000e+00 : f32
    %41 = vector.broadcast %cst_25 : f32 to vector<2x32xf32>
    %42 = arith.addf %41, %40 : vector<2x32xf32>
    %43 = arith.divf %41, %42 : vector<2x32xf32>
    %44 = arith.mulf %35, %18 : vector<2x32xf32>
    %45 = arith.mulf %29, %37 : vector<2x32xf32>
    %46 = arith.addf %44, %45 : vector<2x32xf32>
    %47 = math.tanh %46 : vector<2x32xf32>
    %48 = arith.mulf %43, %47 : vector<2x32xf32>
    %49 = vector.shape_cast %48 : vector<2x32xf32> to vector<2x1x32xf32>
    %c0_26 = arith.constant 0 : index
    %c0_27 = arith.constant 0 : index
    %c0_28 = arith.constant 0 : index
    %50 = vector.load %arg12[%c0_26, %c0_27, %c0_28] : memref<2x8x32xf32, #tpu.memory_space<vmem>>, vector<2x1x32xf32>
    tpu.vector_store %arg12[%c0_26, %c0_27, %c0_28], %49 {strides = array<i32>} : memref<2x8x32xf32, #tpu.memory_space<vmem>>, vector<2x1x32xf32>,
    %c0_29 = arith.constant 0 : index
    %c1 = arith.constant 1 : index
    %c0_30 = arith.constant 0 : index
    %51 = vector.load %arg11[%c0_29, %c1, %c0_30] : memref<2x8x128xf32, #tpu.memory_space<vmem>>, vector<2x1x128xf32>
    %52 = vector.shape_cast %51 : vector<2x1x128xf32> to vector<2x128xf32>
    %53 = arith.truncf %48 : vector<2x32xf32> to vector<2x32xbf16>
    %cst_31 = arith.constant dense<0.000000e+00> : vector<2x128xf32>
    %54 = tpu.matmul %53, %14, %cst_31 {dimension_numbers = #tpu.dot_dimension_numbers<[1], [0], [0], [1], [0, 0, 1, 1], [], []>} : vector<2x32xbf16>, vector<32x128xbf16>, vector<2x128xf32> -> vector<2x128xf32>
    %55 = arith.addf %52, %54 : vector<2x128xf32>
    %56 = vector.extract_strided_slice %55 {offsets = [0, 0], sizes = [2, 32], strides = [1, 1]} : vector<2x128xf32> to vector<2x32xf32>
    %57 = arith.negf %56 : vector<2x32xf32>
    %58 = math.exp %57 : vector<2x32xf32>
    %cst_32 = arith.constant 1.000000e+00 : f32
    %59 = vector.broadcast %cst_32 : f32 to vector<2x32xf32>
    %60 = arith.addf %59, %58 : vector<2x32xf32>
    %61 = arith.divf %59, %60 : vector<2x32xf32>
    %62 = vector.extract_strided_slice %55 {offsets = [0, 32], sizes = [2, 32], strides = [1, 1]} : vector<2x128xf32> to vector<2x32xf32>
    %63 = arith.negf %62 : vector<2x32xf32>
    %64 = math.exp %63 : vector<2x32xf32>
    %cst_33 = arith.constant 1.000000e+00 : f32
    %65 = vector.broadcast %cst_33 : f32 to vector<2x32xf32>
    %66 = arith.addf %65, %64 : vector<2x32xf32>
    %67 = arith.divf %65, %66 : vector<2x32xf32>
    %68 = vector.extract_strided_slice %55 {offsets = [0, 64], sizes = [2, 32], strides = [1, 1]} : vector<2x128xf32> to vector<2x32xf32>
    %69 = math.tanh %68 : vector<2x32xf32>
    %70 = vector.extract_strided_slice %55 {offsets = [0, 96], sizes = [2, 32], strides = [1, 1]} : vector<2x128xf32> to vector<2x32xf32>
    %71 = arith.negf %70 : vector<2x32xf32>
    %72 = math.exp %71 : vector<2x32xf32>
    %cst_34 = arith.constant 1.000000e+00 : f32
    %73 = vector.broadcast %cst_34 : f32 to vector<2x32xf32>
    %74 = arith.addf %73, %72 : vector<2x32xf32>
    %75 = arith.divf %73, %74 : vector<2x32xf32>
    %76 = arith.mulf %67, %46 : vector<2x32xf32>
    %77 = arith.mulf %61, %69 : vector<2x32xf32>
    %78 = arith.addf %76, %77 : vector<2x32xf32>
    %79 = math.tanh %78 : vector<2x32xf32>
    %80 = arith.mulf %75, %79 : vector<2x32xf32>
    %81 = vector.shape_cast %80 : vector<2x32xf32> to vector<2x1x32xf32>
    %c0_35 = arith.constant 0 : index
    %c1_36 = arith.constant 1 : index
    %c0_37 = arith.constant 0 : index
    %82 = vector.load %arg12[%c0_35, %c1_36, %c0_37] : memref<2x8x32xf32, #tpu.memory_space<vmem>>, vector<2x1x32xf32>
    tpu.vector_store %arg12[%c0_35, %c1_36, %c0_37], %81 {strides = array<i32>} : memref<2x8x32xf32, #tpu.memory_space<vmem>>, vector<2x1x32xf32>,
    %c0_38 = arith.constant 0 : index
    %c2 = arith.constant 2 : index
    %c0_39 = arith.constant 0 : index
    %83 = vector.load %arg11[%c0_38, %c2, %c0_39] : memref<2x8x128xf32, #tpu.memory_space<vmem>>, vector<2x1x128xf32>
    %84 = vector.shape_cast %83 : vector<2x1x128xf32> to vector<2x128xf32>
    %85 = arith.truncf %80 : vector<2x32xf32> to vector<2x32xbf16>
    %cst_40 = arith.constant dense<0.000000e+00> : vector<2x128xf32>
    %86 = tpu.matmul %85, %14, %cst_40 {dimension_numbers = #tpu.dot_dimension_numbers<[1], [0], [0], [1], [0, 0, 1, 1], [], []>} : vector<2x32xbf16>, vector<32x128xbf16>, vector<2x128xf32> -> vector<2x128xf32>
    %87 = arith.addf %84, %86 : vector<2x128xf32>
    %88 = vector.extract_strided_slice %87 {offsets = [0, 0], sizes = [2, 32], strides = [1, 1]} : vector<2x128xf32> to vector<2x32xf32>
    %89 = arith.negf %88 : vector<2x32xf32>
    %90 = math.exp %89 : vector<2x32xf32>
    %cst_41 = arith.constant 1.000000e+00 : f32
    %91 = vector.broadcast %cst_41 : f32 to vector<2x32xf32>
    %92 = arith.addf %91, %90 : vector<2x32xf32>
    %93 = arith.divf %91, %92 : vector<2x32xf32>
    %94 = vector.extract_strided_slice %87 {offsets = [0, 32], sizes = [2, 32], strides = [1, 1]} : vector<2x128xf32> to vector<2x32xf32>
    %95 = arith.negf %94 : vector<2x32xf32>
    %96 = math.exp %95 : vector<2x32xf32>
    %cst_42 = arith.constant 1.000000e+00 : f32
    %97 = vector.broadcast %cst_42 : f32 to vector<2x32xf32>
    %98 = arith.addf %97, %96 : vector<2x32xf32>
    %99 = arith.divf %97, %98 : vector<2x32xf32>
    %100 = vector.extract_strided_slice %87 {offsets = [0, 64], sizes = [2, 32], strides = [1, 1]} : vector<2x128xf32> to vector<2x32xf32>
    %101 = math.tanh %100 : vector<2x32xf32>
    %102 = vector.extract_strided_slice %87 {offsets = [0, 96], sizes = [2, 32], strides = [1, 1]} : vector<2x128xf32> to vector<2x32xf32>
    %103 = arith.negf %102 : vector<2x32xf32>
    %104 = math.exp %103 : vector<2x32xf32>
    %cst_43 = arith.constant 1.000000e+00 : f32
    %105 = vector.broadcast %cst_43 : f32 to vector<2x32xf32>
    %106 = arith.addf %105, %104 : vector<2x32xf32>
    %107 = arith.divf %105, %106 : vector<2x32xf32>
    %108 = arith.mulf %99, %78 : vector<2x32xf32>
    %109 = arith.mulf %93, %101 : vector<2x32xf32>
    %110 = arith.addf %108, %109 : vector<2x32xf32>
    %111 = math.tanh %110 : vector<2x32xf32>
    %112 = arith.mulf %107, %111 : vector<2x32xf32>
    %113 = vector.shape_cast %112 : vector<2x32xf32> to vector<2x1x32xf32>
    %c0_44 = arith.constant 0 : index
    %c2_45 = arith.constant 2 : index
    %c0_46 = arith.constant 0 : index
    %114 = vector.load %arg12[%c0_44, %c2_45, %c0_46] : memref<2x8x32xf32, #tpu.memory_space<vmem>>, vector<2x1x32xf32>
    tpu.vector_store %arg12[%c0_44, %c2_45, %c0_46], %113 {strides = array<i32>} : memref<2x8x32xf32, #tpu.memory_space<vmem>>, vector<2x1x32xf32>,
    %c0_47 = arith.constant 0 : index
    %c3 = arith.constant 3 : index
    %c0_48 = arith.constant 0 : index
    %115 = vector.load %arg11[%c0_47, %c3, %c0_48] : memref<2x8x128xf32, #tpu.memory_space<vmem>>, vector<2x1x128xf32>
    %116 = vector.shape_cast %115 : vector<2x1x128xf32> to vector<2x128xf32>
    %117 = arith.truncf %112 : vector<2x32xf32> to vector<2x32xbf16>
    %cst_49 = arith.constant dense<0.000000e+00> : vector<2x128xf32>
    %118 = tpu.matmul %117, %14, %cst_49 {dimension_numbers = #tpu.dot_dimension_numbers<[1], [0], [0], [1], [0, 0, 1, 1], [], []>} : vector<2x32xbf16>, vector<32x128xbf16>, vector<2x128xf32> -> vector<2x128xf32>
    %119 = arith.addf %116, %118 : vector<2x128xf32>
    %120 = vector.extract_strided_slice %119 {offsets = [0, 0], sizes = [2, 32], strides = [1, 1]} : vector<2x128xf32> to vector<2x32xf32>
    %121 = arith.negf %120 : vector<2x32xf32>
    %122 = math.exp %121 : vector<2x32xf32>
    %cst_50 = arith.constant 1.000000e+00 : f32
    %123 = vector.broadcast %cst_50 : f32 to vector<2x32xf32>
    %124 = arith.addf %123, %122 : vector<2x32xf32>
    %125 = arith.divf %123, %124 : vector<2x32xf32>
    %126 = vector.extract_strided_slice %119 {offsets = [0, 32], sizes = [2, 32], strides = [1, 1]} : vector<2x128xf32> to vector<2x32xf32>
    %127 = arith.negf %126 : vector<2x32xf32>
    %128 = math.exp %127 : vector<2x32xf32>
    %cst_51 = arith.constant 1.000000e+00 : f32
    %129 = vector.broadcast %cst_51 : f32 to vector<2x32xf32>
    %130 = arith.addf %129, %128 : vector<2x32xf32>
    %131 = arith.divf %129, %130 : vector<2x32xf32>
    %132 = vector.extract_strided_slice %119 {offsets = [0, 64], sizes = [2, 32], strides = [1, 1]} : vector<2x128xf32> to vector<2x32xf32>
    %133 = math.tanh %132 : vector<2x32xf32>
    %134 = vector.extract_strided_slice %119 {offsets = [0, 96], sizes = [2, 32], strides = [1, 1]} : vector<2x128xf32> to vector<2x32xf32>
    %135 = arith.negf %134 : vector<2x32xf32>
    %136 = math.exp %135 : vector<2x32xf32>
    %cst_52 = arith.constant 1.000000e+00 : f32
    %137 = vector.broadcast %cst_52 : f32 to vector<2x32xf32>
    %138 = arith.addf %137, %136 : vector<2x32xf32>
    %139 = arith.divf %137, %138 : vector<2x32xf32>
    %140 = arith.mulf %131, %110 : vector<2x32xf32>
    %141 = arith.mulf %125, %133 : vector<2x32xf32>
    %142 = arith.addf %140, %141 : vector<2x32xf32>
    %143 = math.tanh %142 : vector<2x32xf32>
    %144 = arith.mulf %139, %143 : vector<2x32xf32>
    %145 = vector.shape_cast %144 : vector<2x32xf32> to vector<2x1x32xf32>
    %c0_53 = arith.constant 0 : index
    %c3_54 = arith.constant 3 : index
    %c0_55 = arith.constant 0 : index
    %146 = vector.load %arg12[%c0_53, %c3_54, %c0_55] : memref<2x8x32xf32, #tpu.memory_space<vmem>>, vector<2x1x32xf32>
    tpu.vector_store %arg12[%c0_53, %c3_54, %c0_55], %145 {strides = array<i32>} : memref<2x8x32xf32, #tpu.memory_space<vmem>>, vector<2x1x32xf32>,
    %c0_56 = arith.constant 0 : index
    %c4 = arith.constant 4 : index
    %c0_57 = arith.constant 0 : index
    %147 = vector.load %arg11[%c0_56, %c4, %c0_57] : memref<2x8x128xf32, #tpu.memory_space<vmem>>, vector<2x1x128xf32>
    %148 = vector.shape_cast %147 : vector<2x1x128xf32> to vector<2x128xf32>
    %149 = arith.truncf %144 : vector<2x32xf32> to vector<2x32xbf16>
    %cst_58 = arith.constant dense<0.000000e+00> : vector<2x128xf32>
    %150 = tpu.matmul %149, %14, %cst_58 {dimension_numbers = #tpu.dot_dimension_numbers<[1], [0], [0], [1], [0, 0, 1, 1], [], []>} : vector<2x32xbf16>, vector<32x128xbf16>, vector<2x128xf32> -> vector<2x128xf32>
    %151 = arith.addf %148, %150 : vector<2x128xf32>
    %152 = vector.extract_strided_slice %151 {offsets = [0, 0], sizes = [2, 32], strides = [1, 1]} : vector<2x128xf32> to vector<2x32xf32>
    %153 = arith.negf %152 : vector<2x32xf32>
    %154 = math.exp %153 : vector<2x32xf32>
    %cst_59 = arith.constant 1.000000e+00 : f32
    %155 = vector.broadcast %cst_59 : f32 to vector<2x32xf32>
    %156 = arith.addf %155, %154 : vector<2x32xf32>
    %157 = arith.divf %155, %156 : vector<2x32xf32>
    %158 = vector.extract_strided_slice %151 {offsets = [0, 32], sizes = [2, 32], strides = [1, 1]} : vector<2x128xf32> to vector<2x32xf32>
    %159 = arith.negf %158 : vector<2x32xf32>
    %160 = math.exp %159 : vector<2x32xf32>
    %cst_60 = arith.constant 1.000000e+00 : f32
    %161 = vector.broadcast %cst_60 : f32 to vector<2x32xf32>
    %162 = arith.addf %161, %160 : vector<2x32xf32>
    %163 = arith.divf %161, %162 : vector<2x32xf32>
    %164 = vector.extract_strided_slice %151 {offsets = [0, 64], sizes = [2, 32], strides = [1, 1]} : vector<2x128xf32> to vector<2x32xf32>
    %165 = math.tanh %164 : vector<2x32xf32>
    %166 = vector.extract_strided_slice %151 {offsets = [0, 96], sizes = [2, 32], strides = [1, 1]} : vector<2x128xf32> to vector<2x32xf32>
    %167 = arith.negf %166 : vector<2x32xf32>
    %168 = math.exp %167 : vector<2x32xf32>
    %cst_61 = arith.constant 1.000000e+00 : f32
    %169 = vector.broadcast %cst_61 : f32 to vector<2x32xf32>
    %170 = arith.addf %169, %168 : vector<2x32xf32>
    %171 = arith.divf %169, %170 : vector<2x32xf32>
    %172 = arith.mulf %163, %142 : vector<2x32xf32>
    %173 = arith.mulf %157, %165 : vector<2x32xf32>
    %174 = arith.addf %172, %173 : vector<2x32xf32>
    %175 = math.tanh %174 : vector<2x32xf32>
    %176 = arith.mulf %171, %175 : vector<2x32xf32>
    %177 = vector.shape_cast %176 : vector<2x32xf32> to vector<2x1x32xf32>
    %c0_62 = arith.constant 0 : index
    %c4_63 = arith.constant 4 : index
    %c0_64 = arith.constant 0 : index
    %178 = vector.load %arg12[%c0_62, %c4_63, %c0_64] : memref<2x8x32xf32, #tpu.memory_space<vmem>>, vector<2x1x32xf32>
    tpu.vector_store %arg12[%c0_62, %c4_63, %c0_64], %177 {strides = array<i32>} : memref<2x8x32xf32, #tpu.memory_space<vmem>>, vector<2x1x32xf32>,
    %c0_65 = arith.constant 0 : index
    %c5 = arith.constant 5 : index
    %c0_66 = arith.constant 0 : index
    %179 = vector.load %arg11[%c0_65, %c5, %c0_66] : memref<2x8x128xf32, #tpu.memory_space<vmem>>, vector<2x1x128xf32>
    %180 = vector.shape_cast %179 : vector<2x1x128xf32> to vector<2x128xf32>
    %181 = arith.truncf %176 : vector<2x32xf32> to vector<2x32xbf16>
    %cst_67 = arith.constant dense<0.000000e+00> : vector<2x128xf32>
    %182 = tpu.matmul %181, %14, %cst_67 {dimension_numbers = #tpu.dot_dimension_numbers<[1], [0], [0], [1], [0, 0, 1, 1], [], []>} : vector<2x32xbf16>, vector<32x128xbf16>, vector<2x128xf32> -> vector<2x128xf32>
    %183 = arith.addf %180, %182 : vector<2x128xf32>
    %184 = vector.extract_strided_slice %183 {offsets = [0, 0], sizes = [2, 32], strides = [1, 1]} : vector<2x128xf32> to vector<2x32xf32>
    %185 = arith.negf %184 : vector<2x32xf32>
    %186 = math.exp %185 : vector<2x32xf32>
    %cst_68 = arith.constant 1.000000e+00 : f32
    %187 = vector.broadcast %cst_68 : f32 to vector<2x32xf32>
    %188 = arith.addf %187, %186 : vector<2x32xf32>
    %189 = arith.divf %187, %188 : vector<2x32xf32>
    %190 = vector.extract_strided_slice %183 {offsets = [0, 32], sizes = [2, 32], strides = [1, 1]} : vector<2x128xf32> to vector<2x32xf32>
    %191 = arith.negf %190 : vector<2x32xf32>
    %192 = math.exp %191 : vector<2x32xf32>
    %cst_69 = arith.constant 1.000000e+00 : f32
    %193 = vector.broadcast %cst_69 : f32 to vector<2x32xf32>
    %194 = arith.addf %193, %192 : vector<2x32xf32>
    %195 = arith.divf %193, %194 : vector<2x32xf32>
    %196 = vector.extract_strided_slice %183 {offsets = [0, 64], sizes = [2, 32], strides = [1, 1]} : vector<2x128xf32> to vector<2x32xf32>
    %197 = math.tanh %196 : vector<2x32xf32>
    %198 = vector.extract_strided_slice %183 {offsets = [0, 96], sizes = [2, 32], strides = [1, 1]} : vector<2x128xf32> to vector<2x32xf32>
    %199 = arith.negf %198 : vector<2x32xf32>
    %200 = math.exp %199 : vector<2x32xf32>
    %cst_70 = arith.constant 1.000000e+00 : f32
    %201 = vector.broadcast %cst_70 : f32 to vector<2x32xf32>
    %202 = arith.addf %201, %200 : vector<2x32xf32>
    %203 = arith.divf %201, %202 : vector<2x32xf32>
    %204 = arith.mulf %195, %174 : vector<2x32xf32>
    %205 = arith.mulf %189, %197 : vector<2x32xf32>
    %206 = arith.addf %204, %205 : vector<2x32xf32>
    %207 = math.tanh %206 : vector<2x32xf32>
    %208 = arith.mulf %203, %207 : vector<2x32xf32>
    %209 = vector.shape_cast %208 : vector<2x32xf32> to vector<2x1x32xf32>
    %c0_71 = arith.constant 0 : index
    %c5_72 = arith.constant 5 : index
    %c0_73 = arith.constant 0 : index
    %210 = vector.load %arg12[%c0_71, %c5_72, %c0_73] : memref<2x8x32xf32, #tpu.memory_space<vmem>>, vector<2x1x32xf32>
    tpu.vector_store %arg12[%c0_71, %c5_72, %c0_73], %209 {strides = array<i32>} : memref<2x8x32xf32, #tpu.memory_space<vmem>>, vector<2x1x32xf32>,
    %c0_74 = arith.constant 0 : index
    %c6 = arith.constant 6 : index
    %c0_75 = arith.constant 0 : index
    %211 = vector.load %arg11[%c0_74, %c6, %c0_75] : memref<2x8x128xf32, #tpu.memory_space<vmem>>, vector<2x1x128xf32>
    %212 = vector.shape_cast %211 : vector<2x1x128xf32> to vector<2x128xf32>
    %213 = arith.truncf %208 : vector<2x32xf32> to vector<2x32xbf16>
    %cst_76 = arith.constant dense<0.000000e+00> : vector<2x128xf32>
    %214 = tpu.matmul %213, %14, %cst_76 {dimension_numbers = #tpu.dot_dimension_numbers<[1], [0], [0], [1], [0, 0, 1, 1], [], []>} : vector<2x32xbf16>, vector<32x128xbf16>, vector<2x128xf32> -> vector<2x128xf32>
    %215 = arith.addf %212, %214 : vector<2x128xf32>
    %216 = vector.extract_strided_slice %215 {offsets = [0, 0], sizes = [2, 32], strides = [1, 1]} : vector<2x128xf32> to vector<2x32xf32>
    %217 = arith.negf %216 : vector<2x32xf32>
    %218 = math.exp %217 : vector<2x32xf32>
    %cst_77 = arith.constant 1.000000e+00 : f32
    %219 = vector.broadcast %cst_77 : f32 to vector<2x32xf32>
    %220 = arith.addf %219, %218 : vector<2x32xf32>
    %221 = arith.divf %219, %220 : vector<2x32xf32>
    %222 = vector.extract_strided_slice %215 {offsets = [0, 32], sizes = [2, 32], strides = [1, 1]} : vector<2x128xf32> to vector<2x32xf32>
    %223 = arith.negf %222 : vector<2x32xf32>
    %224 = math.exp %223 : vector<2x32xf32>
    %cst_78 = arith.constant 1.000000e+00 : f32
    %225 = vector.broadcast %cst_78 : f32 to vector<2x32xf32>
    %226 = arith.addf %225, %224 : vector<2x32xf32>
    %227 = arith.divf %225, %226 : vector<2x32xf32>
    %228 = vector.extract_strided_slice %215 {offsets = [0, 64], sizes = [2, 32], strides = [1, 1]} : vector<2x128xf32> to vector<2x32xf32>
    %229 = math.tanh %228 : vector<2x32xf32>
    %230 = vector.extract_strided_slice %215 {offsets = [0, 96], sizes = [2, 32], strides = [1, 1]} : vector<2x128xf32> to vector<2x32xf32>
    %231 = arith.negf %230 : vector<2x32xf32>
    %232 = math.exp %231 : vector<2x32xf32>
    %cst_79 = arith.constant 1.000000e+00 : f32
    %233 = vector.broadcast %cst_79 : f32 to vector<2x32xf32>
    %234 = arith.addf %233, %232 : vector<2x32xf32>
    %235 = arith.divf %233, %234 : vector<2x32xf32>
    %236 = arith.mulf %227, %206 : vector<2x32xf32>
    %237 = arith.mulf %221, %229 : vector<2x32xf32>
    %238 = arith.addf %236, %237 : vector<2x32xf32>
    %239 = math.tanh %238 : vector<2x32xf32>
    %240 = arith.mulf %235, %239 : vector<2x32xf32>
    %241 = vector.shape_cast %240 : vector<2x32xf32> to vector<2x1x32xf32>
    %c0_80 = arith.constant 0 : index
    %c6_81 = arith.constant 6 : index
    %c0_82 = arith.constant 0 : index
    %242 = vector.load %arg12[%c0_80, %c6_81, %c0_82] : memref<2x8x32xf32, #tpu.memory_space<vmem>>, vector<2x1x32xf32>
    tpu.vector_store %arg12[%c0_80, %c6_81, %c0_82], %241 {strides = array<i32>} : memref<2x8x32xf32, #tpu.memory_space<vmem>>, vector<2x1x32xf32>,
    %c0_83 = arith.constant 0 : index
    %c7 = arith.constant 7 : index
    %c0_84 = arith.constant 0 : index
    %243 = vector.load %arg11[%c0_83, %c7, %c0_84] : memref<2x8x128xf32, #tpu.memory_space<vmem>>, vector<2x1x128xf32>
    %244 = vector.shape_cast %243 : vector<2x1x128xf32> to vector<2x128xf32>
    %245 = arith.truncf %240 : vector<2x32xf32> to vector<2x32xbf16>
    %cst_85 = arith.constant dense<0.000000e+00> : vector<2x128xf32>
    %246 = tpu.matmul %245, %14, %cst_85 {dimension_numbers = #tpu.dot_dimension_numbers<[1], [0], [0], [1], [0, 0, 1, 1], [], []>} : vector<2x32xbf16>, vector<32x128xbf16>, vector<2x128xf32> -> vector<2x128xf32>
    %247 = arith.addf %244, %246 : vector<2x128xf32>
    %248 = vector.extract_strided_slice %247 {offsets = [0, 0], sizes = [2, 32], strides = [1, 1]} : vector<2x128xf32> to vector<2x32xf32>
    %249 = arith.negf %248 : vector<2x32xf32>
    %250 = math.exp %249 : vector<2x32xf32>
    %cst_86 = arith.constant 1.000000e+00 : f32
    %251 = vector.broadcast %cst_86 : f32 to vector<2x32xf32>
    %252 = arith.addf %251, %250 : vector<2x32xf32>
    %253 = arith.divf %251, %252 : vector<2x32xf32>
    %254 = vector.extract_strided_slice %247 {offsets = [0, 32], sizes = [2, 32], strides = [1, 1]} : vector<2x128xf32> to vector<2x32xf32>
    %255 = arith.negf %254 : vector<2x32xf32>
    %256 = math.exp %255 : vector<2x32xf32>
    %cst_87 = arith.constant 1.000000e+00 : f32
    %257 = vector.broadcast %cst_87 : f32 to vector<2x32xf32>
    %258 = arith.addf %257, %256 : vector<2x32xf32>
    %259 = arith.divf %257, %258 : vector<2x32xf32>
    %260 = vector.extract_strided_slice %247 {offsets = [0, 64], sizes = [2, 32], strides = [1, 1]} : vector<2x128xf32> to vector<2x32xf32>
    %261 = math.tanh %260 : vector<2x32xf32>
    %262 = vector.extract_strided_slice %247 {offsets = [0, 96], sizes = [2, 32], strides = [1, 1]} : vector<2x128xf32> to vector<2x32xf32>
    %263 = arith.negf %262 : vector<2x32xf32>
    %264 = math.exp %263 : vector<2x32xf32>
    %cst_88 = arith.constant 1.000000e+00 : f32
    %265 = vector.broadcast %cst_88 : f32 to vector<2x32xf32>
    %266 = arith.addf %265, %264 : vector<2x32xf32>
    %267 = arith.divf %265, %266 : vector<2x32xf32>
    %268 = arith.mulf %259, %238 : vector<2x32xf32>
    %269 = arith.mulf %253, %261 : vector<2x32xf32>
    %270 = arith.addf %268, %269 : vector<2x32xf32>
    %271 = math.tanh %270 : vector<2x32xf32>
    %272 = arith.mulf %267, %271 : vector<2x32xf32>
    %273 = vector.shape_cast %272 : vector<2x32xf32> to vector<2x1x32xf32>
    %c0_89 = arith.constant 0 : index
    %c7_90 = arith.constant 7 : index
    %c0_91 = arith.constant 0 : index
    %274 = vector.load %arg12[%c0_89, %c7_90, %c0_91] : memref<2x8x32xf32, #tpu.memory_space<vmem>>, vector<2x1x32xf32>
    tpu.vector_store %arg12[%c0_89, %c7_90, %c0_91], %273 {strides = array<i32>} : memref<2x8x32xf32, #tpu.memory_space<vmem>>, vector<2x1x32xf32>,
    %c0_92 = arith.constant 0 : index
    %c0_93 = arith.constant 0 : index
    %c0_94 = arith.constant 0 : index
    %275 = vector.load %arg9[%c0_92, %c0_93, %c0_94] : memref<2x2x32xf32, #tpu.memory_space<vmem>>, vector<1x2x32xf32>
    %276 = vector.shape_cast %275 : vector<1x2x32xf32> to vector<2x32xf32>
    %277 = vector.shape_cast %272 : vector<2x32xf32> to vector<1x2x32xf32>
    tpu.vector_store %arg9[%c0_92, %c0_93, %c0_94], %277 {strides = array<i32>} : memref<2x2x32xf32, #tpu.memory_space<vmem>>, vector<1x2x32xf32>,
    %c0_95 = arith.constant 0 : index
    %c0_96 = arith.constant 0 : index
    %c0_97 = arith.constant 0 : index
    %278 = vector.load %arg10[%c0_95, %c0_96, %c0_97] : memref<2x2x32xf32, #tpu.memory_space<vmem>>, vector<1x2x32xf32>
    %279 = vector.shape_cast %278 : vector<1x2x32xf32> to vector<2x32xf32>
    %280 = vector.shape_cast %270 : vector<2x32xf32> to vector<1x2x32xf32>
    tpu.vector_store %arg10[%c0_95, %c0_96, %c0_97], %280 {strides = array<i32>} : memref<2x2x32xf32, #tpu.memory_space<vmem>>, vector<1x2x32xf32>,
    %c0_98 = arith.constant 0 : index
    %c0_99 = arith.constant 0 : index
    %c0_100 = arith.constant 0 : index
    %281 = vector.load %arg12[%c0_98, %c0_99, %c0_100] : memref<2x8x32xf32, #tpu.memory_space<vmem>>, vector<2x8x32xf32>
    %282 = vector.shape_cast %281 : vector<2x8x32xf32> to vector<16x32xf32>
    %283 = arith.truncf %282 : vector<16x32xf32> to vector<16x32xbf16>
    %c0_101 = arith.constant 0 : index
    %c0_102 = arith.constant 0 : index
    %c0_103 = arith.constant 0 : index
    %284 = vector.load %arg6[%c0_101, %c0_102, %c0_103] : memref<1x32x128xbf16, #tpu.memory_space<vmem>>, vector<1x32x128xbf16>
    %285 = vector.shape_cast %284 : vector<1x32x128xbf16> to vector<32x128xbf16>
    %cst_104 = arith.constant dense<0.000000e+00> : vector<16x128xf32>
    %286 = tpu.matmul %283, %285, %cst_104 {dimension_numbers = #tpu.dot_dimension_numbers<[1], [0], [0], [1], [0, 0, 1, 1], [], []>} : vector<16x32xbf16>, vector<32x128xbf16>, vector<16x128xf32> -> vector<16x128xf32>
    %c0_105 = arith.constant 0 : index
    %c0_106 = arith.constant 0 : index
    %c0_107 = arith.constant 0 : index
    %287 = vector.load %arg7[%c0_105, %c0_106, %c0_107] : memref<1x1x128xf32, #tpu.memory_space<vmem>>, vector<1x1x128xf32>
    %288 = vector.shape_cast %287 : vector<1x1x128xf32> to vector<1x128xf32>
    %289 = vector.broadcast %288 : vector<1x128xf32> to vector<16x128xf32>
    %290 = arith.addf %286, %289 : vector<16x128xf32>
    %291 = vector.shape_cast %290 : vector<16x128xf32> to vector<2x8x128xf32>
    %c0_108 = arith.constant 0 : index
    %c0_109 = arith.constant 0 : index
    %c0_110 = arith.constant 0 : index
    %292 = vector.load %arg11[%c0_108, %c0_109, %c0_110] : memref<2x8x128xf32, #tpu.memory_space<vmem>>, vector<2x8x128xf32>
    tpu.vector_store %arg11[%c0_108, %c0_109, %c0_110], %291 {strides = array<i32>} : memref<2x8x128xf32, #tpu.memory_space<vmem>>, vector<2x8x128xf32>,
    %c1_111 = arith.constant 1 : index
    %c0_112 = arith.constant 0 : index
    %c0_113 = arith.constant 0 : index
    %293 = vector.load %arg5[%c1_111, %c0_112, %c0_113] : memref<2x32x128xbf16, #tpu.memory_space<vmem>>, vector<1x32x128xbf16>
    %294 = vector.shape_cast %293 : vector<1x32x128xbf16> to vector<32x128xbf16>
    %c1_114 = arith.constant 1 : index
    %c0_115 = arith.constant 0 : index
    %c0_116 = arith.constant 0 : index
    %295 = vector.load %arg9[%c1_114, %c0_115, %c0_116] : memref<2x2x32xf32, #tpu.memory_space<vmem>>, vector<1x2x32xf32>
    %296 = vector.shape_cast %295 : vector<1x2x32xf32> to vector<2x32xf32>
    %c1_117 = arith.constant 1 : index
    %c0_118 = arith.constant 0 : index
    %c0_119 = arith.constant 0 : index
    %297 = vector.load %arg10[%c1_117, %c0_118, %c0_119] : memref<2x2x32xf32, #tpu.memory_space<vmem>>, vector<1x2x32xf32>
    %298 = vector.shape_cast %297 : vector<1x2x32xf32> to vector<2x32xf32>
    %c0_120 = arith.constant 0 : index
    %c0_121 = arith.constant 0 : index
    %c0_122 = arith.constant 0 : index
    %299 = vector.load %arg11[%c0_120, %c0_121, %c0_122] : memref<2x8x128xf32, #tpu.memory_space<vmem>>, vector<2x1x128xf32>
    %300 = vector.shape_cast %299 : vector<2x1x128xf32> to vector<2x128xf32>
    %301 = arith.truncf %296 : vector<2x32xf32> to vector<2x32xbf16>
    %cst_123 = arith.constant dense<0.000000e+00> : vector<2x128xf32>
    %302 = tpu.matmul %301, %294, %cst_123 {dimension_numbers = #tpu.dot_dimension_numbers<[1], [0], [0], [1], [0, 0, 1, 1], [], []>} : vector<2x32xbf16>, vector<32x128xbf16>, vector<2x128xf32> -> vector<2x128xf32>
    %303 = arith.addf %300, %302 : vector<2x128xf32>
    %304 = vector.extract_strided_slice %303 {offsets = [0, 0], sizes = [2, 32], strides = [1, 1]} : vector<2x128xf32> to vector<2x32xf32>
    %305 = arith.negf %304 : vector<2x32xf32>
    %306 = math.exp %305 : vector<2x32xf32>
    %cst_124 = arith.constant 1.000000e+00 : f32
    %307 = vector.broadcast %cst_124 : f32 to vector<2x32xf32>
    %308 = arith.addf %307, %306 : vector<2x32xf32>
    %309 = arith.divf %307, %308 : vector<2x32xf32>
    %310 = vector.extract_strided_slice %303 {offsets = [0, 32], sizes = [2, 32], strides = [1, 1]} : vector<2x128xf32> to vector<2x32xf32>
    %311 = arith.negf %310 : vector<2x32xf32>
    %312 = math.exp %311 : vector<2x32xf32>
    %cst_125 = arith.constant 1.000000e+00 : f32
    %313 = vector.broadcast %cst_125 : f32 to vector<2x32xf32>
    %314 = arith.addf %313, %312 : vector<2x32xf32>
    %315 = arith.divf %313, %314 : vector<2x32xf32>
    %316 = vector.extract_strided_slice %303 {offsets = [0, 64], sizes = [2, 32], strides = [1, 1]} : vector<2x128xf32> to vector<2x32xf32>
    %317 = math.tanh %316 : vector<2x32xf32>
    %318 = vector.extract_strided_slice %303 {offsets = [0, 96], sizes = [2, 32], strides = [1, 1]} : vector<2x128xf32> to vector<2x32xf32>
    %319 = arith.negf %318 : vector<2x32xf32>
    %320 = math.exp %319 : vector<2x32xf32>
    %cst_126 = arith.constant 1.000000e+00 : f32
    %321 = vector.broadcast %cst_126 : f32 to vector<2x32xf32>
    %322 = arith.addf %321, %320 : vector<2x32xf32>
    %323 = arith.divf %321, %322 : vector<2x32xf32>
    %324 = arith.mulf %315, %298 : vector<2x32xf32>
    %325 = arith.mulf %309, %317 : vector<2x32xf32>
    %326 = arith.addf %324, %325 : vector<2x32xf32>
    %327 = math.tanh %326 : vector<2x32xf32>
    %328 = arith.mulf %323, %327 : vector<2x32xf32>
    %329 = vector.shape_cast %328 : vector<2x32xf32> to vector<2x1x32xf32>
    %c0_127 = arith.constant 0 : index
    %c0_128 = arith.constant 0 : index
    %c0_129 = arith.constant 0 : index
    %330 = vector.load %arg12[%c0_127, %c0_128, %c0_129] : memref<2x8x32xf32, #tpu.memory_space<vmem>>, vector<2x1x32xf32>
    tpu.vector_store %arg12[%c0_127, %c0_128, %c0_129], %329 {strides = array<i32>} : memref<2x8x32xf32, #tpu.memory_space<vmem>>, vector<2x1x32xf32>,
    %c0_130 = arith.constant 0 : index
    %c1_131 = arith.constant 1 : index
    %c0_132 = arith.constant 0 : index
    %331 = vector.load %arg11[%c0_130, %c1_131, %c0_132] : memref<2x8x128xf32, #tpu.memory_space<vmem>>, vector<2x1x128xf32>
    %332 = vector.shape_cast %331 : vector<2x1x128xf32> to vector<2x128xf32>
    %333 = arith.truncf %328 : vector<2x32xf32> to vector<2x32xbf16>
    %cst_133 = arith.constant dense<0.000000e+00> : vector<2x128xf32>
    %334 = tpu.matmul %333, %294, %cst_133 {dimension_numbers = #tpu.dot_dimension_numbers<[1], [0], [0], [1], [0, 0, 1, 1], [], []>} : vector<2x32xbf16>, vector<32x128xbf16>, vector<2x128xf32> -> vector<2x128xf32>
    %335 = arith.addf %332, %334 : vector<2x128xf32>
    %336 = vector.extract_strided_slice %335 {offsets = [0, 0], sizes = [2, 32], strides = [1, 1]} : vector<2x128xf32> to vector<2x32xf32>
    %337 = arith.negf %336 : vector<2x32xf32>
    %338 = math.exp %337 : vector<2x32xf32>
    %cst_134 = arith.constant 1.000000e+00 : f32
    %339 = vector.broadcast %cst_134 : f32 to vector<2x32xf32>
    %340 = arith.addf %339, %338 : vector<2x32xf32>
    %341 = arith.divf %339, %340 : vector<2x32xf32>
    %342 = vector.extract_strided_slice %335 {offsets = [0, 32], sizes = [2, 32], strides = [1, 1]} : vector<2x128xf32> to vector<2x32xf32>
    %343 = arith.negf %342 : vector<2x32xf32>
    %344 = math.exp %343 : vector<2x32xf32>
    %cst_135 = arith.constant 1.000000e+00 : f32
    %345 = vector.broadcast %cst_135 : f32 to vector<2x32xf32>
    %346 = arith.addf %345, %344 : vector<2x32xf32>
    %347 = arith.divf %345, %346 : vector<2x32xf32>
    %348 = vector.extract_strided_slice %335 {offsets = [0, 64], sizes = [2, 32], strides = [1, 1]} : vector<2x128xf32> to vector<2x32xf32>
    %349 = math.tanh %348 : vector<2x32xf32>
    %350 = vector.extract_strided_slice %335 {offsets = [0, 96], sizes = [2, 32], strides = [1, 1]} : vector<2x128xf32> to vector<2x32xf32>
    %351 = arith.negf %350 : vector<2x32xf32>
    %352 = math.exp %351 : vector<2x32xf32>
    %cst_136 = arith.constant 1.000000e+00 : f32
    %353 = vector.broadcast %cst_136 : f32 to vector<2x32xf32>
    %354 = arith.addf %353, %352 : vector<2x32xf32>
    %355 = arith.divf %353, %354 : vector<2x32xf32>
    %356 = arith.mulf %347, %326 : vector<2x32xf32>
    %357 = arith.mulf %341, %349 : vector<2x32xf32>
    %358 = arith.addf %356, %357 : vector<2x32xf32>
    %359 = math.tanh %358 : vector<2x32xf32>
    %360 = arith.mulf %355, %359 : vector<2x32xf32>
    %361 = vector.shape_cast %360 : vector<2x32xf32> to vector<2x1x32xf32>
    %c0_137 = arith.constant 0 : index
    %c1_138 = arith.constant 1 : index
    %c0_139 = arith.constant 0 : index
    %362 = vector.load %arg12[%c0_137, %c1_138, %c0_139] : memref<2x8x32xf32, #tpu.memory_space<vmem>>, vector<2x1x32xf32>
    tpu.vector_store %arg12[%c0_137, %c1_138, %c0_139], %361 {strides = array<i32>} : memref<2x8x32xf32, #tpu.memory_space<vmem>>, vector<2x1x32xf32>,
    %c0_140 = arith.constant 0 : index
    %c2_141 = arith.constant 2 : index
    %c0_142 = arith.constant 0 : index
    %363 = vector.load %arg11[%c0_140, %c2_141, %c0_142] : memref<2x8x128xf32, #tpu.memory_space<vmem>>, vector<2x1x128xf32>
    %364 = vector.shape_cast %363 : vector<2x1x128xf32> to vector<2x128xf32>
    %365 = arith.truncf %360 : vector<2x32xf32> to vector<2x32xbf16>
    %cst_143 = arith.constant dense<0.000000e+00> : vector<2x128xf32>
    %366 = tpu.matmul %365, %294, %cst_143 {dimension_numbers = #tpu.dot_dimension_numbers<[1], [0], [0], [1], [0, 0, 1, 1], [], []>} : vector<2x32xbf16>, vector<32x128xbf16>, vector<2x128xf32> -> vector<2x128xf32>
    %367 = arith.addf %364, %366 : vector<2x128xf32>
    %368 = vector.extract_strided_slice %367 {offsets = [0, 0], sizes = [2, 32], strides = [1, 1]} : vector<2x128xf32> to vector<2x32xf32>
    %369 = arith.negf %368 : vector<2x32xf32>
    %370 = math.exp %369 : vector<2x32xf32>
    %cst_144 = arith.constant 1.000000e+00 : f32
    %371 = vector.broadcast %cst_144 : f32 to vector<2x32xf32>
    %372 = arith.addf %371, %370 : vector<2x32xf32>
    %373 = arith.divf %371, %372 : vector<2x32xf32>
    %374 = vector.extract_strided_slice %367 {offsets = [0, 32], sizes = [2, 32], strides = [1, 1]} : vector<2x128xf32> to vector<2x32xf32>
    %375 = arith.negf %374 : vector<2x32xf32>
    %376 = math.exp %375 : vector<2x32xf32>
    %cst_145 = arith.constant 1.000000e+00 : f32
    %377 = vector.broadcast %cst_145 : f32 to vector<2x32xf32>
    %378 = arith.addf %377, %376 : vector<2x32xf32>
    %379 = arith.divf %377, %378 : vector<2x32xf32>
    %380 = vector.extract_strided_slice %367 {offsets = [0, 64], sizes = [2, 32], strides = [1, 1]} : vector<2x128xf32> to vector<2x32xf32>
    %381 = math.tanh %380 : vector<2x32xf32>
    %382 = vector.extract_strided_slice %367 {offsets = [0, 96], sizes = [2, 32], strides = [1, 1]} : vector<2x128xf32> to vector<2x32xf32>
    %383 = arith.negf %382 : vector<2x32xf32>
    %384 = math.exp %383 : vector<2x32xf32>
    %cst_146 = arith.constant 1.000000e+00 : f32
    %385 = vector.broadcast %cst_146 : f32 to vector<2x32xf32>
    %386 = arith.addf %385, %384 : vector<2x32xf32>
    %387 = arith.divf %385, %386 : vector<2x32xf32>
    %388 = arith.mulf %379, %358 : vector<2x32xf32>
    %389 = arith.mulf %373, %381 : vector<2x32xf32>
    %390 = arith.addf %388, %389 : vector<2x32xf32>
    %391 = math.tanh %390 : vector<2x32xf32>
    %392 = arith.mulf %387, %391 : vector<2x32xf32>
    %393 = vector.shape_cast %392 : vector<2x32xf32> to vector<2x1x32xf32>
    %c0_147 = arith.constant 0 : index
    %c2_148 = arith.constant 2 : index
    %c0_149 = arith.constant 0 : index
    %394 = vector.load %arg12[%c0_147, %c2_148, %c0_149] : memref<2x8x32xf32, #tpu.memory_space<vmem>>, vector<2x1x32xf32>
    tpu.vector_store %arg12[%c0_147, %c2_148, %c0_149], %393 {strides = array<i32>} : memref<2x8x32xf32, #tpu.memory_space<vmem>>, vector<2x1x32xf32>,
    %c0_150 = arith.constant 0 : index
    %c3_151 = arith.constant 3 : index
    %c0_152 = arith.constant 0 : index
    %395 = vector.load %arg11[%c0_150, %c3_151, %c0_152] : memref<2x8x128xf32, #tpu.memory_space<vmem>>, vector<2x1x128xf32>
    %396 = vector.shape_cast %395 : vector<2x1x128xf32> to vector<2x128xf32>
    %397 = arith.truncf %392 : vector<2x32xf32> to vector<2x32xbf16>
    %cst_153 = arith.constant dense<0.000000e+00> : vector<2x128xf32>
    %398 = tpu.matmul %397, %294, %cst_153 {dimension_numbers = #tpu.dot_dimension_numbers<[1], [0], [0], [1], [0, 0, 1, 1], [], []>} : vector<2x32xbf16>, vector<32x128xbf16>, vector<2x128xf32> -> vector<2x128xf32>
    %399 = arith.addf %396, %398 : vector<2x128xf32>
    %400 = vector.extract_strided_slice %399 {offsets = [0, 0], sizes = [2, 32], strides = [1, 1]} : vector<2x128xf32> to vector<2x32xf32>
    %401 = arith.negf %400 : vector<2x32xf32>
    %402 = math.exp %401 : vector<2x32xf32>
    %cst_154 = arith.constant 1.000000e+00 : f32
    %403 = vector.broadcast %cst_154 : f32 to vector<2x32xf32>
    %404 = arith.addf %403, %402 : vector<2x32xf32>
    %405 = arith.divf %403, %404 : vector<2x32xf32>
    %406 = vector.extract_strided_slice %399 {offsets = [0, 32], sizes = [2, 32], strides = [1, 1]} : vector<2x128xf32> to vector<2x32xf32>
    %407 = arith.negf %406 : vector<2x32xf32>
    %408 = math.exp %407 : vector<2x32xf32>
    %cst_155 = arith.constant 1.000000e+00 : f32
    %409 = vector.broadcast %cst_155 : f32 to vector<2x32xf32>
    %410 = arith.addf %409, %408 : vector<2x32xf32>
    %411 = arith.divf %409, %410 : vector<2x32xf32>
    %412 = vector.extract_strided_slice %399 {offsets = [0, 64], sizes = [2, 32], strides = [1, 1]} : vector<2x128xf32> to vector<2x32xf32>
    %413 = math.tanh %412 : vector<2x32xf32>
    %414 = vector.extract_strided_slice %399 {offsets = [0, 96], sizes = [2, 32], strides = [1, 1]} : vector<2x128xf32> to vector<2x32xf32>
    %415 = arith.negf %414 : vector<2x32xf32>
    %416 = math.exp %415 : vector<2x32xf32>
    %cst_156 = arith.constant 1.000000e+00 : f32
    %417 = vector.broadcast %cst_156 : f32 to vector<2x32xf32>
    %418 = arith.addf %417, %416 : vector<2x32xf32>
    %419 = arith.divf %417, %418 : vector<2x32xf32>
    %420 = arith.mulf %411, %390 : vector<2x32xf32>
    %421 = arith.mulf %405, %413 : vector<2x32xf32>
    %422 = arith.addf %420, %421 : vector<2x32xf32>
    %423 = math.tanh %422 : vector<2x32xf32>
    %424 = arith.mulf %419, %423 : vector<2x32xf32>
    %425 = vector.shape_cast %424 : vector<2x32xf32> to vector<2x1x32xf32>
    %c0_157 = arith.constant 0 : index
    %c3_158 = arith.constant 3 : index
    %c0_159 = arith.constant 0 : index
    %426 = vector.load %arg12[%c0_157, %c3_158, %c0_159] : memref<2x8x32xf32, #tpu.memory_space<vmem>>, vector<2x1x32xf32>
    tpu.vector_store %arg12[%c0_157, %c3_158, %c0_159], %425 {strides = array<i32>} : memref<2x8x32xf32, #tpu.memory_space<vmem>>, vector<2x1x32xf32>,
    %c0_160 = arith.constant 0 : index
    %c4_161 = arith.constant 4 : index
    %c0_162 = arith.constant 0 : index
    %427 = vector.load %arg11[%c0_160, %c4_161, %c0_162] : memref<2x8x128xf32, #tpu.memory_space<vmem>>, vector<2x1x128xf32>
    %428 = vector.shape_cast %427 : vector<2x1x128xf32> to vector<2x128xf32>
    %429 = arith.truncf %424 : vector<2x32xf32> to vector<2x32xbf16>
    %cst_163 = arith.constant dense<0.000000e+00> : vector<2x128xf32>
    %430 = tpu.matmul %429, %294, %cst_163 {dimension_numbers = #tpu.dot_dimension_numbers<[1], [0], [0], [1], [0, 0, 1, 1], [], []>} : vector<2x32xbf16>, vector<32x128xbf16>, vector<2x128xf32> -> vector<2x128xf32>
    %431 = arith.addf %428, %430 : vector<2x128xf32>
    %432 = vector.extract_strided_slice %431 {offsets = [0, 0], sizes = [2, 32], strides = [1, 1]} : vector<2x128xf32> to vector<2x32xf32>
    %433 = arith.negf %432 : vector<2x32xf32>
    %434 = math.exp %433 : vector<2x32xf32>
    %cst_164 = arith.constant 1.000000e+00 : f32
    %435 = vector.broadcast %cst_164 : f32 to vector<2x32xf32>
    %436 = arith.addf %435, %434 : vector<2x32xf32>
    %437 = arith.divf %435, %436 : vector<2x32xf32>
    %438 = vector.extract_strided_slice %431 {offsets = [0, 32], sizes = [2, 32], strides = [1, 1]} : vector<2x128xf32> to vector<2x32xf32>
    %439 = arith.negf %438 : vector<2x32xf32>
    %440 = math.exp %439 : vector<2x32xf32>
    %cst_165 = arith.constant 1.000000e+00 : f32
    %441 = vector.broadcast %cst_165 : f32 to vector<2x32xf32>
    %442 = arith.addf %441, %440 : vector<2x32xf32>
    %443 = arith.divf %441, %442 : vector<2x32xf32>
    %444 = vector.extract_strided_slice %431 {offsets = [0, 64], sizes = [2, 32], strides = [1, 1]} : vector<2x128xf32> to vector<2x32xf32>
    %445 = math.tanh %444 : vector<2x32xf32>
    %446 = vector.extract_strided_slice %431 {offsets = [0, 96], sizes = [2, 32], strides = [1, 1]} : vector<2x128xf32> to vector<2x32xf32>
    %447 = arith.negf %446 : vector<2x32xf32>
    %448 = math.exp %447 : vector<2x32xf32>
    %cst_166 = arith.constant 1.000000e+00 : f32
    %449 = vector.broadcast %cst_166 : f32 to vector<2x32xf32>
    %450 = arith.addf %449, %448 : vector<2x32xf32>
    %451 = arith.divf %449, %450 : vector<2x32xf32>
    %452 = arith.mulf %443, %422 : vector<2x32xf32>
    %453 = arith.mulf %437, %445 : vector<2x32xf32>
    %454 = arith.addf %452, %453 : vector<2x32xf32>
    %455 = math.tanh %454 : vector<2x32xf32>
    %456 = arith.mulf %451, %455 : vector<2x32xf32>
    %457 = vector.shape_cast %456 : vector<2x32xf32> to vector<2x1x32xf32>
    %c0_167 = arith.constant 0 : index
    %c4_168 = arith.constant 4 : index
    %c0_169 = arith.constant 0 : index
    %458 = vector.load %arg12[%c0_167, %c4_168, %c0_169] : memref<2x8x32xf32, #tpu.memory_space<vmem>>, vector<2x1x32xf32>
    tpu.vector_store %arg12[%c0_167, %c4_168, %c0_169], %457 {strides = array<i32>} : memref<2x8x32xf32, #tpu.memory_space<vmem>>, vector<2x1x32xf32>,
    %c0_170 = arith.constant 0 : index
    %c5_171 = arith.constant 5 : index
    %c0_172 = arith.constant 0 : index
    %459 = vector.load %arg11[%c0_170, %c5_171, %c0_172] : memref<2x8x128xf32, #tpu.memory_space<vmem>>, vector<2x1x128xf32>
    %460 = vector.shape_cast %459 : vector<2x1x128xf32> to vector<2x128xf32>
    %461 = arith.truncf %456 : vector<2x32xf32> to vector<2x32xbf16>
    %cst_173 = arith.constant dense<0.000000e+00> : vector<2x128xf32>
    %462 = tpu.matmul %461, %294, %cst_173 {dimension_numbers = #tpu.dot_dimension_numbers<[1], [0], [0], [1], [0, 0, 1, 1], [], []>} : vector<2x32xbf16>, vector<32x128xbf16>, vector<2x128xf32> -> vector<2x128xf32>
    %463 = arith.addf %460, %462 : vector<2x128xf32>
    %464 = vector.extract_strided_slice %463 {offsets = [0, 0], sizes = [2, 32], strides = [1, 1]} : vector<2x128xf32> to vector<2x32xf32>
    %465 = arith.negf %464 : vector<2x32xf32>
    %466 = math.exp %465 : vector<2x32xf32>
    %cst_174 = arith.constant 1.000000e+00 : f32
    %467 = vector.broadcast %cst_174 : f32 to vector<2x32xf32>
    %468 = arith.addf %467, %466 : vector<2x32xf32>
    %469 = arith.divf %467, %468 : vector<2x32xf32>
    %470 = vector.extract_strided_slice %463 {offsets = [0, 32], sizes = [2, 32], strides = [1, 1]} : vector<2x128xf32> to vector<2x32xf32>
    %471 = arith.negf %470 : vector<2x32xf32>
    %472 = math.exp %471 : vector<2x32xf32>
    %cst_175 = arith.constant 1.000000e+00 : f32
    %473 = vector.broadcast %cst_175 : f32 to vector<2x32xf32>
    %474 = arith.addf %473, %472 : vector<2x32xf32>
    %475 = arith.divf %473, %474 : vector<2x32xf32>
    %476 = vector.extract_strided_slice %463 {offsets = [0, 64], sizes = [2, 32], strides = [1, 1]} : vector<2x128xf32> to vector<2x32xf32>
    %477 = math.tanh %476 : vector<2x32xf32>
    %478 = vector.extract_strided_slice %463 {offsets = [0, 96], sizes = [2, 32], strides = [1, 1]} : vector<2x128xf32> to vector<2x32xf32>
    %479 = arith.negf %478 : vector<2x32xf32>
    %480 = math.exp %479 : vector<2x32xf32>
    %cst_176 = arith.constant 1.000000e+00 : f32
    %481 = vector.broadcast %cst_176 : f32 to vector<2x32xf32>
    %482 = arith.addf %481, %480 : vector<2x32xf32>
    %483 = arith.divf %481, %482 : vector<2x32xf32>
    %484 = arith.mulf %475, %454 : vector<2x32xf32>
    %485 = arith.mulf %469, %477 : vector<2x32xf32>
    %486 = arith.addf %484, %485 : vector<2x32xf32>
    %487 = math.tanh %486 : vector<2x32xf32>
    %488 = arith.mulf %483, %487 : vector<2x32xf32>
    %489 = vector.shape_cast %488 : vector<2x32xf32> to vector<2x1x32xf32>
    %c0_177 = arith.constant 0 : index
    %c5_178 = arith.constant 5 : index
    %c0_179 = arith.constant 0 : index
    %490 = vector.load %arg12[%c0_177, %c5_178, %c0_179] : memref<2x8x32xf32, #tpu.memory_space<vmem>>, vector<2x1x32xf32>
    tpu.vector_store %arg12[%c0_177, %c5_178, %c0_179], %489 {strides = array<i32>} : memref<2x8x32xf32, #tpu.memory_space<vmem>>, vector<2x1x32xf32>,
    %c0_180 = arith.constant 0 : index
    %c6_181 = arith.constant 6 : index
    %c0_182 = arith.constant 0 : index
    %491 = vector.load %arg11[%c0_180, %c6_181, %c0_182] : memref<2x8x128xf32, #tpu.memory_space<vmem>>, vector<2x1x128xf32>
    %492 = vector.shape_cast %491 : vector<2x1x128xf32> to vector<2x128xf32>
    %493 = arith.truncf %488 : vector<2x32xf32> to vector<2x32xbf16>
    %cst_183 = arith.constant dense<0.000000e+00> : vector<2x128xf32>
    %494 = tpu.matmul %493, %294, %cst_183 {dimension_numbers = #tpu.dot_dimension_numbers<[1], [0], [0], [1], [0, 0, 1, 1], [], []>} : vector<2x32xbf16>, vector<32x128xbf16>, vector<2x128xf32> -> vector<2x128xf32>
    %495 = arith.addf %492, %494 : vector<2x128xf32>
    %496 = vector.extract_strided_slice %495 {offsets = [0, 0], sizes = [2, 32], strides = [1, 1]} : vector<2x128xf32> to vector<2x32xf32>
    %497 = arith.negf %496 : vector<2x32xf32>
    %498 = math.exp %497 : vector<2x32xf32>
    %cst_184 = arith.constant 1.000000e+00 : f32
    %499 = vector.broadcast %cst_184 : f32 to vector<2x32xf32>
    %500 = arith.addf %499, %498 : vector<2x32xf32>
    %501 = arith.divf %499, %500 : vector<2x32xf32>
    %502 = vector.extract_strided_slice %495 {offsets = [0, 32], sizes = [2, 32], strides = [1, 1]} : vector<2x128xf32> to vector<2x32xf32>
    %503 = arith.negf %502 : vector<2x32xf32>
    %504 = math.exp %503 : vector<2x32xf32>
    %cst_185 = arith.constant 1.000000e+00 : f32
    %505 = vector.broadcast %cst_185 : f32 to vector<2x32xf32>
    %506 = arith.addf %505, %504 : vector<2x32xf32>
    %507 = arith.divf %505, %506 : vector<2x32xf32>
    %508 = vector.extract_strided_slice %495 {offsets = [0, 64], sizes = [2, 32], strides = [1, 1]} : vector<2x128xf32> to vector<2x32xf32>
    %509 = math.tanh %508 : vector<2x32xf32>
    %510 = vector.extract_strided_slice %495 {offsets = [0, 96], sizes = [2, 32], strides = [1, 1]} : vector<2x128xf32> to vector<2x32xf32>
    %511 = arith.negf %510 : vector<2x32xf32>
    %512 = math.exp %511 : vector<2x32xf32>
    %cst_186 = arith.constant 1.000000e+00 : f32
    %513 = vector.broadcast %cst_186 : f32 to vector<2x32xf32>
    %514 = arith.addf %513, %512 : vector<2x32xf32>
    %515 = arith.divf %513, %514 : vector<2x32xf32>
    %516 = arith.mulf %507, %486 : vector<2x32xf32>
    %517 = arith.mulf %501, %509 : vector<2x32xf32>
    %518 = arith.addf %516, %517 : vector<2x32xf32>
    %519 = math.tanh %518 : vector<2x32xf32>
    %520 = arith.mulf %515, %519 : vector<2x32xf32>
    %521 = vector.shape_cast %520 : vector<2x32xf32> to vector<2x1x32xf32>
    %c0_187 = arith.constant 0 : index
    %c6_188 = arith.constant 6 : index
    %c0_189 = arith.constant 0 : index
    %522 = vector.load %arg12[%c0_187, %c6_188, %c0_189] : memref<2x8x32xf32, #tpu.memory_space<vmem>>, vector<2x1x32xf32>
    tpu.vector_store %arg12[%c0_187, %c6_188, %c0_189], %521 {strides = array<i32>} : memref<2x8x32xf32, #tpu.memory_space<vmem>>, vector<2x1x32xf32>,
    %c0_190 = arith.constant 0 : index
    %c7_191 = arith.constant 7 : index
    %c0_192 = arith.constant 0 : index
    %523 = vector.load %arg11[%c0_190, %c7_191, %c0_192] : memref<2x8x128xf32, #tpu.memory_space<vmem>>, vector<2x1x128xf32>
    %524 = vector.shape_cast %523 : vector<2x1x128xf32> to vector<2x128xf32>
    %525 = arith.truncf %520 : vector<2x32xf32> to vector<2x32xbf16>
    %cst_193 = arith.constant dense<0.000000e+00> : vector<2x128xf32>
    %526 = tpu.matmul %525, %294, %cst_193 {dimension_numbers = #tpu.dot_dimension_numbers<[1], [0], [0], [1], [0, 0, 1, 1], [], []>} : vector<2x32xbf16>, vector<32x128xbf16>, vector<2x128xf32> -> vector<2x128xf32>
    %527 = arith.addf %524, %526 : vector<2x128xf32>
    %528 = vector.extract_strided_slice %527 {offsets = [0, 0], sizes = [2, 32], strides = [1, 1]} : vector<2x128xf32> to vector<2x32xf32>
    %529 = arith.negf %528 : vector<2x32xf32>
    %530 = math.exp %529 : vector<2x32xf32>
    %cst_194 = arith.constant 1.000000e+00 : f32
    %531 = vector.broadcast %cst_194 : f32 to vector<2x32xf32>
    %532 = arith.addf %531, %530 : vector<2x32xf32>
    %533 = arith.divf %531, %532 : vector<2x32xf32>
    %534 = vector.extract_strided_slice %527 {offsets = [0, 32], sizes = [2, 32], strides = [1, 1]} : vector<2x128xf32> to vector<2x32xf32>
    %535 = arith.negf %534 : vector<2x32xf32>
    %536 = math.exp %535 : vector<2x32xf32>
    %cst_195 = arith.constant 1.000000e+00 : f32
    %537 = vector.broadcast %cst_195 : f32 to vector<2x32xf32>
    %538 = arith.addf %537, %536 : vector<2x32xf32>
    %539 = arith.divf %537, %538 : vector<2x32xf32>
    %540 = vector.extract_strided_slice %527 {offsets = [0, 64], sizes = [2, 32], strides = [1, 1]} : vector<2x128xf32> to vector<2x32xf32>
    %541 = math.tanh %540 : vector<2x32xf32>
    %542 = vector.extract_strided_slice %527 {offsets = [0, 96], sizes = [2, 32], strides = [1, 1]} : vector<2x128xf32> to vector<2x32xf32>
    %543 = arith.negf %542 : vector<2x32xf32>
    %544 = math.exp %543 : vector<2x32xf32>
    %cst_196 = arith.constant 1.000000e+00 : f32
    %545 = vector.broadcast %cst_196 : f32 to vector<2x32xf32>
    %546 = arith.addf %545, %544 : vector<2x32xf32>
    %547 = arith.divf %545, %546 : vector<2x32xf32>
    %548 = arith.mulf %539, %518 : vector<2x32xf32>
    %549 = arith.mulf %533, %541 : vector<2x32xf32>
    %550 = arith.addf %548, %549 : vector<2x32xf32>
    %551 = math.tanh %550 : vector<2x32xf32>
    %552 = arith.mulf %547, %551 : vector<2x32xf32>
    %553 = vector.shape_cast %552 : vector<2x32xf32> to vector<2x1x32xf32>
    %c0_197 = arith.constant 0 : index
    %c7_198 = arith.constant 7 : index
    %c0_199 = arith.constant 0 : index
    %554 = vector.load %arg12[%c0_197, %c7_198, %c0_199] : memref<2x8x32xf32, #tpu.memory_space<vmem>>, vector<2x1x32xf32>
    tpu.vector_store %arg12[%c0_197, %c7_198, %c0_199], %553 {strides = array<i32>} : memref<2x8x32xf32, #tpu.memory_space<vmem>>, vector<2x1x32xf32>,
    %c1_200 = arith.constant 1 : index
    %c0_201 = arith.constant 0 : index
    %c0_202 = arith.constant 0 : index
    %555 = vector.load %arg9[%c1_200, %c0_201, %c0_202] : memref<2x2x32xf32, #tpu.memory_space<vmem>>, vector<1x2x32xf32>
    %556 = vector.shape_cast %555 : vector<1x2x32xf32> to vector<2x32xf32>
    %557 = vector.shape_cast %552 : vector<2x32xf32> to vector<1x2x32xf32>
    tpu.vector_store %arg9[%c1_200, %c0_201, %c0_202], %557 {strides = array<i32>} : memref<2x2x32xf32, #tpu.memory_space<vmem>>, vector<1x2x32xf32>,
    %c1_203 = arith.constant 1 : index
    %c0_204 = arith.constant 0 : index
    %c0_205 = arith.constant 0 : index
    %558 = vector.load %arg10[%c1_203, %c0_204, %c0_205] : memref<2x2x32xf32, #tpu.memory_space<vmem>>, vector<1x2x32xf32>
    %559 = vector.shape_cast %558 : vector<1x2x32xf32> to vector<2x32xf32>
    %560 = vector.shape_cast %550 : vector<2x32xf32> to vector<1x2x32xf32>
    tpu.vector_store %arg10[%c1_203, %c0_204, %c0_205], %560 {strides = array<i32>} : memref<2x2x32xf32, #tpu.memory_space<vmem>>, vector<1x2x32xf32>,
    %c0_206 = arith.constant 0 : index
    %c0_207 = arith.constant 0 : index
    %c0_208 = arith.constant 0 : index
    %561 = vector.load %arg12[%c0_206, %c0_207, %c0_208] : memref<2x8x32xf32, #tpu.memory_space<vmem>>, vector<2x8x32xf32>
    %c0_209 = arith.constant 0 : index
    %c0_210 = arith.constant 0 : index
    %c0_211 = arith.constant 0 : index
    %562 = vector.load %arg8[%c0_209, %c0_210, %c0_211] : memref<2x8x32xf32, #tpu.memory_space<vmem>>, vector<2x8x32xf32>
    tpu.vector_store %arg8[%c0_209, %c0_210, %c0_211], %561 {strides = array<i32>} : memref<2x8x32xf32, #tpu.memory_space<vmem>>, vector<2x8x32xf32>,
    return
  }
  func.func @transform_0(%arg0: i32, %arg1: i32) -> (i32, i32, i32) {
    %c0_i32 = arith.constant 0 : i32
    %c0_i32_0 = arith.constant 0 : i32
    return %arg0, %arg1, %c0_i32 : i32, i32, i32
  }
  func.func @transform_1(%arg0: i32, %arg1: i32) -> (i32, i32) {
    %c0_i32 = arith.constant 0 : i32
    %c0_i32_0 = arith.constant 0 : i32
    %c0_i32_1 = arith.constant 0 : i32
    return %c0_i32, %c0_i32_0 : i32, i32
  }
  func.func @transform_2(%arg0: i32, %arg1: i32) -> (i32, i32) {
    %c0_i32 = arith.constant 0 : i32
    %c0_i32_0 = arith.constant 0 : i32
    %c0_i32_1 = arith.constant 0 : i32
    return %c0_i32, %c0_i32_0 : i32, i32
  }
  func.func @transform_3(%arg0: i32, %arg1: i32) -> (i32, i32, i32) {
    %c0_i32 = arith.constant 0 : i32
    %c0_i32_0 = arith.constant 0 : i32
    %c0_i32_1 = arith.constant 0 : i32
    %c0_i32_2 = arith.constant 0 : i32
    return %c0_i32, %c0_i32_0, %c0_i32_1 : i32, i32, i32
  }
  func.func @transform_4(%arg0: i32, %arg1: i32) -> (i32, i32, i32) {
    %c0_i32 = arith.constant 0 : i32
    %c0_i32_0 = arith.constant 0 : i32
    %c0_i32_1 = arith.constant 0 : i32
    %c0_i32_2 = arith.constant 0 : i32
    return %c0_i32, %c0_i32_0, %c0_i32_1 : i32, i32, i32
  }
  func.func @transform_5(%arg0: i32, %arg1: i32) -> (i32, i32, i32) {
    %c0_i32 = arith.constant 0 : i32
    %c0_i32_0 = arith.constant 0 : i32
    %c0_i32_1 = arith.constant 0 : i32
    %c0_i32_2 = arith.constant 0 : i32
    return %c0_i32, %c0_i32_0, %c0_i32_1 : i32, i32, i32
  }
  func.func @transform_6(%arg0: i32, %arg1: i32) -> (i32, i32, i32) {
    %c0_i32 = arith.constant 0 : i32
    %c0_i32_0 = arith.constant 0 : i32
    return %arg0, %arg1, %c0_i32 : i32, i32, i32
  }
}

</mosaic_0001>

<llo_original>
// kernel: summarizer_forward.1
$region0: #{summarizer_forward.1}
  #allocation0 [shape = 'u32[]', space=smem, size = 0x4, offset = 0x4, fixed_abs, tag = 'smem constant byte address 0x4 - core index']
  #allocation1 [shape = 'u32[72,128]{1,0:T(1,128)}', space=vmem, size = 0x9000, scoped, tag = 'internal scratch']
  #allocation2 [shape = 'f32[2,2,32]{2,1,0:T(2,128)}', space=vmem, size = 0x800, scoped, tag = 'scratch operand']
  #allocation3 [shape = 'f32[2,2,32]{2,1,0:T(2,128)}', space=vmem, size = 0x800, scoped, tag = 'scratch operand']
  #allocation4 [shape = 'f32[2,8,128]{2,1,0:T(8,128)}', space=vmem, size = 0x2000, scoped, tag = 'scratch operand']
  #allocation5 [shape = 'f32[2,8,32]{2,1,0:T(8,128)}', space=vmem, size = 0x2000, scoped, tag = 'scratch operand']
  %s0 = inlined_call_operand.hbm [shape: f32[2,8,32], index: 0, kind: input, shape index: {}]
  %s1 = inlined_call_operand.hbm [shape: bf16[32,128], index: 1, kind: input, shape index: {}]
  %s2 = inlined_call_operand.hbm [shape: f32[1,128], index: 2, kind: input, shape index: {}]
  %s3 = inlined_call_operand.hbm [shape: bf16[2,32,128], index: 3, kind: input, shape index: {}]
  %s4 = inlined_call_operand.hbm [shape: bf16[1,32,128], index: 4, kind: input, shape index: {}]
  %s5 = inlined_call_operand.vmem [shape: f32[1,1,128], index: 5, kind: input, shape index: {}]
  %s6 = inlined_call_operand.hbm [shape: f32[2,8,32], index: 6, kind: output, shape index: {}]
  %s7 = sld [smem:[#allocation0]]
  $region58: #{summarizer_forward.1} parent=0
    _
  %s9 = ssub.s32 1, %s7
  %s10 = scalar_select 0, %s9, %s7
  $region1: #{summarizer_forward.1} parent=0
    #allocation6 [shape = 'u8[8192]{0}', space=vmem, size = 0x2000, scoped, tag = 'input window, operand 0, single buffered']
    #allocation7 [shape = 's32[1]{0}', space=sflag, size = 0x4, scoped, tag = 'scoped memory for summarizer_forward.1']
    #allocation8 [shape = 's32[1]{0}', space=sflag, size = 0x4, scoped, tag = 'scoped memory for summarizer_forward.1']
    #allocation9 [shape = 'u8[8192]{0}', space=vmem, size = 0x2000, scoped, tag = 'input window, operand 1, single buffered']
    #allocation10 [shape = 's32[1]{0}', space=sflag, size = 0x4, scoped, tag = 'scoped memory for summarizer_forward.1']
    #allocation11 [shape = 'u8[512]{0}', space=vmem, size = 0x400, scoped, tag = 'input window, operand 2, single buffered']
    #allocation12 [shape = 'u8[16384]{0}', space=vmem, size = 0x4000, scoped, tag = 'input window, operand 3, single buffered']
    #allocation13 [shape = 's32[1]{0}', space=sflag, size = 0x4, scoped, tag = 'scoped memory for summarizer_forward.1']
    #allocation14 [shape = 'u8[8192]{0}', space=vmem, size = 0x2000, scoped, tag = 'input window, operand 4, single buffered']
    #allocation15 [shape = 'u8[8192]{0}', space=vmem, size = 0x2000, scoped, tag = 'output window, operand 0, single buffered']
    %11 = vsyncpa [#allocation7], 0
    %12 = vsyncpa [#allocation10], 0
    %13 = vsyncpa [#allocation13], 0
    %14 = vsyncpa [#allocation8], 0
    // Predicated region
    $region2: #{summarizer_forward.1} parent=1 // pred_check
      _
    $region3: #{summarizer_forward.1} parent=1 // pred_check_branch
      %16 = sbr.rel (0) target = $region5
    $region4: #{summarizer_forward.1} parent=1 // pred_region
      %18 = vsyncadd [#allocation7], 0
      %s19 = sshll.u32 %s0, 4
      %s20 = int_to_ptr.hbm [resolvable:$true] %s19
      %s21 = sshll.u32 [#allocation6], 4
      %s22 = int_to_ptr.vmem [resolvable:$true] %s21
      %27 = dma.hbm_to_vmem [thread:$0]  %s20, 256, %s22, [#allocation7], 128, 128, 8
    $region5: #{summarizer_forward.1} parent=1 // pred_fallthru
      _
    // Predicated region
    $region6: #{summarizer_forward.1} parent=1 // pred_check
      _
    $region7: #{summarizer_forward.1} parent=1 // pred_check_branch
      %29 = sbr.rel (0) target = $region9
    $region8: #{summarizer_forward.1} parent=1 // pred_region
      %31 = vsyncadd [#allocation10], 0
      %s32 = sshll.u32 %s1, 4
      %s33 = int_to_ptr.hbm [resolvable:$true] %s32
      %s34 = sshll.u32 [#allocation9], 4
      %s35 = int_to_ptr.vmem [resolvable:$true] %s34
      %40 = dma.hbm_to_vmem [thread:$0]  %s33, 256, %s35, [#allocation10], 64, 64, 4
    $region9: #{summarizer_forward.1} parent=1 // pred_fallthru
      _
    // Predicated region
    $region10: #{summarizer_forward.1} parent=1 // pred_check
      _
    $region11: #{summarizer_forward.1} parent=1 // pred_check_branch
      %42 = sbr.rel (0) target = $region13
    $region12: #{summarizer_forward.1} parent=1 // pred_region
      %44 = vsyncadd [#allocation10], 0
      %s46 = sshll.u32 %s2, 4
      %s47 = int_to_ptr.hbm [resolvable:$true] %s46
      %s48 = sshll.u32 [#allocation11], 4
      %s49 = int_to_ptr.vmem [resolvable:$true] %s48
      %51 = dma.hbm_to_vmem [thread:$0]  %s47, 16, %s49, [#allocation10]
    $region13: #{summarizer_forward.1} parent=1 // pred_fallthru
      _
    // Predicated region
    $region14: #{summarizer_forward.1} parent=1 // pred_check
      _
    $region15: #{summarizer_forward.1} parent=1 // pred_check_branch
      %53 = sbr.rel (0) target = $region17
    $region16: #{summarizer_forward.1} parent=1 // pred_region
      %55 = vsyncadd [#allocation13], 0
      %s56 = sshll.u32 %s3, 4
      %s57 = int_to_ptr.hbm [resolvable:$true] %s56
      %s58 = sshll.u32 [#allocation12], 4
      %s59 = int_to_ptr.vmem [resolvable:$true] %s58
      %64 = dma.hbm_to_vmem [thread:$0]  %s57, 512, %s59, [#allocation13], 64, 64, 4
    $region17: #{summarizer_forward.1} parent=1 // pred_fallthru
      _
    // Predicated region
    $region18: #{summarizer_forward.1} parent=1 // pred_check
      _
    $region19: #{summarizer_forward.1} parent=1 // pred_check_branch
      %66 = sbr.rel (0) target = $region21
    $region20: #{summarizer_forward.1} parent=1 // pred_region
      %68 = vsyncadd [#allocation13], 0
      %s69 = sshll.u32 %s4, 4
      %s70 = int_to_ptr.hbm [resolvable:$true] %s69
      %s71 = sshll.u32 [#allocation14], 4
      %s72 = int_to_ptr.vmem [resolvable:$true] %s71
      %77 = dma.hbm_to_vmem [thread:$0]  %s70, 256, %s72, [#allocation13], 64, 64, 4
    $region21: #{summarizer_forward.1} parent=1 // pred_fallthru
      _
    // Predicated region
    $region22: #{summarizer_forward.1} parent=1 // pred_check
      _
    $region23: #{summarizer_forward.1} parent=1 // pred_check_branch
      %79 = sbr.rel (0) target = $region25
    $region24: #{summarizer_forward.1} parent=1 // pred_region
      _
    $region25: #{summarizer_forward.1} parent=1 // pred_fallthru
      _
    // Predicated region
    $region26: #{summarizer_forward.1} parent=1 // pred_check
      _
    $region27: #{summarizer_forward.1} parent=1 // pred_check_branch
      %81 = sbr.rel (0) target = $region29
    $region28: #{summarizer_forward.1} parent=1 // pred_region
      %83 = dma.done [#allocation7], 256
    $region29: #{summarizer_forward.1} parent=1 // pred_fallthru
      _
    // Predicated region
    $region30: #{summarizer_forward.1} parent=1 // pred_check
      _
    $region31: #{summarizer_forward.1} parent=1 // pred_check_branch
      %85 = sbr.rel (0) target = $region33
    $region32: #{summarizer_forward.1} parent=1 // pred_region
      %87 = dma.done [#allocation10], 256
    $region33: #{summarizer_forward.1} parent=1 // pred_fallthru
      _
    // Predicated region
    $region34: #{summarizer_forward.1} parent=1 // pred_check
      _
    $region35: #{summarizer_forward.1} parent=1 // pred_check_branch
      %89 = sbr.rel (0) target = $region37
    $region36: #{summarizer_forward.1} parent=1 // pred_region
      %91 = dma.done [#allocation10], 16
    $region37: #{summarizer_forward.1} parent=1 // pred_fallthru
      _
    // Predicated region
    $region38: #{summarizer_forward.1} parent=1 // pred_check
      _
    $region39: #{summarizer_forward.1} parent=1 // pred_check_branch
      %93 = sbr.rel (0) target = $region41
    $region40: #{summarizer_forward.1} parent=1 // pred_region
      %95 = dma.done [#allocation13], 512
    $region41: #{summarizer_forward.1} parent=1 // pred_fallthru
      _
    // Predicated region
    $region42: #{summarizer_forward.1} parent=1 // pred_check
      _
    $region43: #{summarizer_forward.1} parent=1 // pred_check_branch
      %97 = sbr.rel (0) target = $region45
    $region44: #{summarizer_forward.1} parent=1 // pred_region
      %99 = dma.done [#allocation13], 256
    $region45: #{summarizer_forward.1} parent=1 // pred_fallthru
      _
    %p101 = scmp.eq.s32.totalorder 0, 0
    // Predicated region
    $region46: #{summarizer_forward.1} parent=1 // pred_check
      %p102 = pneg %p101
    $region47: #{summarizer_forward.1} parent=1 // pred_check_branch
      %104 = sbr.rel (%p102) target = $region49
    $region48: #{summarizer_forward.1} parent=1 // pred_region
      %vm105 = vcmask 254976
      %106 = vst.msk [vmem:[#allocation2] sm:$0x3] %vm105, 0.0
      %107 = vst.msk [vmem:[#allocation2 + $0x2] sm:$0x3] %vm105, 0.0
      %108 = vst.msk [vmem:[#allocation3] sm:$0x3] %vm105, 0.0
      %109 = vst.msk [vmem:[#allocation3 + $0x2] sm:$0x3] %vm105, 0.0
    $region49: #{summarizer_forward.1} parent=1 // pred_fallthru
      _
    %v110 = vld [vmem:[#allocation6] sm:$0xff]
    %v111 = vld [vmem:[#allocation6 + $0x8] sm:$0xff]
    %v112 = vpack.c.bf16 %v110, %v110
    %v113 = vpack.c.bf16 %v111, %v111
    %v114 = vld [vmem:[#allocation9] sm:$0xf]
    %v115 = vld [vmem:[#allocation9 + $0x4] sm:$0xf]
    %v116 = vld [vmem:[#allocation9 + $0x8] sm:$0xf]
    %v117 = vld [vmem:[#allocation9 + $0xc] sm:$0xf]
    %v118 = vld [vmem:[#allocation11] sm:$0x1]
    %v120 = vperm.slane %v118, 0
    %v124 = vunpack.c.l.b16 %v112
    %v125 = vunpack.c.l.b16 %v113
    %v126 = vpack.c.b16 %v125, %v124
    %v131 = vunpack.c.l.b16 %v114
    %v132 = vunpack.c.l.b16 %v115
    %v133 = vunpack.c.l.b16 %v116
    %v134 = vunpack.c.l.b16 %v117
    %v135 = vpack.c.b16 %v132, %v131
    %v136 = vpack.c.b16 %v134, %v133
    %vm139 = vcmask 261120
    %v141 = vsel %vm139, %v126, 0
    %143 = vmatpush.bf16.msra.mxu0 0
    %144 = vmatpush.bf16.msra.mxu0 0
    %145 = vmatpush.bf16.msra.mxu0 0
    %146 = vmatpush.bf16.msra.mxu0 0
    %147 = vmatpush.bf16.msra.mxu0 0
    %148 = vmatpush.bf16.msra.mxu0 0
    %149 = vmatpush.bf16.msra.mxu0 %v136
    %150 = vmatpush.bf16.msra.mxu0 %v135
    %151 = vmatmul.bf16.gmra.mxu0 %v141
    %v152 = vpop.f32.mrf.mxu0
    %v153 = vadd.f32 %v120, %v152
    %v154 = vpop.f32.mrf.mxu0
    %v155 = vadd.f32 %v120, %v154
    %156 = vdwg.mxu0
    %157 = vst [vmem:[#allocation4] sm:$0xff] %v153
    %158 = vst [vmem:[#allocation4 + $0x8] sm:$0xff] %v155
    %v159 = vld [vmem:[#allocation12] sm:$0xf]
    %v160 = vld [vmem:[#allocation12 + $0x4] sm:$0xf]
    %v161 = vld [vmem:[#allocation12 + $0x8] sm:$0xf]
    %v162 = vld [vmem:[#allocation12 + $0xc] sm:$0xf]
    %v163 = vld [vmem:[#allocation2] sm:$0x3]
    %v164 = vld [vmem:[#allocation3] sm:$0x3]
    %v165 = vld [vmem:[#allocation4] sm:$0x1]
    %v166 = vld [vmem:[#allocation4 + $0x8] sm:$0x1]
    %v167 = vpack.c.bf16 %v163, %v163
    %v172 = vunpack.c.l.b16 %v159
    %v173 = vunpack.c.l.b16 %v160
    %v174 = vunpack.c.l.b16 %v161
    %v175 = vunpack.c.l.b16 %v162
    %v176 = vpack.c.b16 %v173, %v172
    %v177 = vpack.c.b16 %v175, %v174
    %v181 = vsel %vm139, %v167, 0
    %183 = vmatpush.bf16.msra.mxu0 0
    %184 = vmatpush.bf16.msra.mxu0 0
    %185 = vmatpush.bf16.msra.mxu0 0
    %186 = vmatpush.bf16.msra.mxu0 0
    %187 = vmatpush.bf16.msra.mxu0 0
    %188 = vmatpush.bf16.msra.mxu0 0
    %189 = vmatpush.bf16.msra.mxu0 %v177
    %190 = vmatpush.bf16.msra.mxu0 %v176
    %191 = vmatmul.bf16.gmra.mxu0 %v181
    %v192 = vpop.f32.mrf.mxu0
    %v193 = vadd.f32 0.0, %v192
    %v194 = vpop.f32.mrf.mxu0
    %195 = vdwg.mxu0
    %v197 = vrot.slane %v193, 1
    %v200 = vadd.f32 %v165, %v193
    %v201 = vadd.f32 %v166, %v197
    %v202 = vxor.u32 %v200, 2147483648
    %v203 = vxor.u32 %v201, 2147483648
    %v204 = vmul.f32 %v202, 1.442695
    %v205 = vpow.pop %v204
    %v206 = vmul.f32 %v203, 1.442695
    %v207 = vpow.pop %v206
    %v208 = vadd.f32 %v205, 1.0
    %v209 = vadd.f32 %v207, 1.0
    %v210 = vrcp.pop %v208
    %v211 = vmul.f32 %v208, %v210
    %v212 = vsub.f32 1.0, %v211
    %v213 = vmul.f32 %v210, %v212
    %v214 = vadd.f32 %v210, %v213
    %vm215 = vweird.f32 %v208
    %vm216 = vweird.f32 %v210
    %vm217 = vmor %vm215, %vm216
    %v218 = vsel %vm217, %v210, %v214
    %v219 = vand.u32 2147483647, %v208
    %vm220 = vcmp.eq.f32.partialorder %v219, 8.507059e+37
    %v221 = vand.u32 %v208, 2147483648
    %v222 = vor.u32 1.1754944e-38, %v221
    %v223 = vsel %vm220, %v222, %v218
    %v224 = vmul.f32 1.0, %v223
    %v225 = vrcp.pop %v209
    %v226 = vmul.f32 %v209, %v225
    %v227 = vsub.f32 1.0, %v226
    %v228 = vmul.f32 %v225, %v227
    %v229 = vadd.f32 %v225, %v228
    %vm230 = vweird.f32 %v209
    %vm231 = vweird.f32 %v225
    %vm232 = vmor %vm230, %vm231
    %v233 = vsel %vm232, %v225, %v229
    %v234 = vand.u32 2147483647, %v209
    %vm235 = vcmp.eq.f32.partialorder %v234, 8.507059e+37
    %v236 = vand.u32 %v209, 2147483648
    %v237 = vor.u32 1.1754944e-38, %v236
    %v238 = vsel %vm235, %v237, %v233
    %v239 = vmul.f32 1.0, %v238
    %v240 = vtanh.pop %v200
    %v241 = vtanh.pop %v201
    %v243 = vrot.slane %v164, 1
    %244 = vrot.lane.b32.xlu0 %v164, 32
    %v245 = vpop.permute.xlu0 %244
    %246 = vrot.lane.b32.xlu0 %v243, 32
    %v247 = vpop.permute.xlu0 %246
    %v250 = vmul.f32 %v224, %v245
    %v251 = vmul.f32 %v239, %v247
    %254 = vrot.lane.b32.xlu0 %v240, 64
    %v255 = vpop.permute.xlu0 %254
    %256 = vrot.lane.b32.xlu0 %v241, 64
    %v257 = vpop.permute.xlu0 %256
    %v260 = vmul.f32 %v224, %v255
    %v261 = vmul.f32 %v239, %v257
    %264 = vrot.lane.b32.xlu0 %v260, 32
    %v265 = vpop.permute.xlu0 %264
    %266 = vrot.lane.b32.xlu0 %v261, 32
    %v267 = vpop.permute.xlu0 %266
    %v270 = vadd.f32 %v250, %v265
    %v271 = vadd.f32 %v251, %v267
    %v272 = vtanh.pop %v270
    %v273 = vtanh.pop %v271
    %276 = vrot.lane.b32.xlu0 %v272, 64
    %v277 = vpop.permute.xlu0 %276
    %278 = vrot.lane.b32.xlu0 %v273, 64
    %v279 = vpop.permute.xlu0 %278
    %v282 = vmul.f32 %v224, %v277
    %v283 = vmul.f32 %v239, %v279
    %286 = vrot.lane.b32.xlu0 %v282, 32
    %v287 = vpop.permute.xlu0 %286
    %288 = vrot.lane.b32.xlu0 %v283, 32
    %v289 = vpop.permute.xlu0 %288
    %vm292 = vcmask 253952
    %293 = vst.msk [vmem:[#allocation5] sm:$0x1] %vm292, %v287
    %294 = vst.msk [vmem:[#allocation5 + $0x8] sm:$0x1] %vm292, %v289
    %v295 = vld [vmem:[#allocation4 + $0x1] sm:$0x1]
    %v296 = vld [vmem:[#allocation4 + $0x9] sm:$0x1]
    %v297 = vpack.c.bf16 %v282, %v282
    %v298 = vpack.c.bf16 %v283, %v283
    %v301 = vunpack.c.l.b16 %v297
    %v302 = vunpack.c.l.b16 %v298
    %v303 = vrot.slane %v302, 7
    %vm304 = vcmask 1041409
    %v305 = vsel %vm304, %v303, %v301
    %v306 = vpack.c.b16 %v305, %v305
    %307 = vrot.lane.b32.xlu0 %v306, 32
    %v308 = vpop.permute.xlu0 %307
    %v310 = vsel %vm139, %v308, 0
    %312 = vmatpush.bf16.msra.mxu0 0
    %313 = vmatpush.bf16.msra.mxu0 0
    %314 = vmatpush.bf16.msra.mxu0 0
    %315 = vmatpush.bf16.msra.mxu0 0
    %316 = vmatpush.bf16.msra.mxu0 0
    %317 = vmatpush.bf16.msra.mxu0 0
    %318 = vmatpush.bf16.msra.mxu0 %v177
    %319 = vmatpush.bf16.msra.mxu0 %v176
    %320 = vmatmul.bf16.gmra.mxu0 %v310
    %v321 = vpop.f32.mrf.mxu0
    %v322 = vadd.f32 0.0, %v321
    %v323 = vpop.f32.mrf.mxu0
    %324 = vdwg.mxu0
    %v326 = vrot.slane %v322, 1
    %v329 = vadd.f32 %v295, %v322
    %v330 = vadd.f32 %v296, %v326
    %v331 = vxor.u32 %v329, 2147483648
    %v332 = vxor.u32 %v330, 2147483648
    %v333 = vmul.f32 %v331, 1.442695
    %v334 = vpow.pop %v333
    %v335 = vmul.f32 %v332, 1.442695
    %v336 = vpow.pop %v335
    %v337 = vadd.f32 %v334, 1.0
    %v338 = vadd.f32 %v336, 1.0
    %v339 = vrcp.pop %v337
    %v340 = vmul.f32 %v337, %v339
    %v341 = vsub.f32 1.0, %v340
    %v342 = vmul.f32 %v339, %v341
    %v343 = vadd.f32 %v339, %v342
    %vm344 = vweird.f32 %v337
    %vm345 = vweird.f32 %v339
    %vm346 = vmor %vm344, %vm345
    %v347 = vsel %vm346, %v339, %v343
    %v348 = vand.u32 2147483647, %v337
    %vm349 = vcmp.eq.f32.partialorder %v348, 8.507059e+37
    %v350 = vand.u32 %v337, 2147483648
    %v351 = vor.u32 1.1754944e-38, %v350
    %v352 = vsel %vm349, %v351, %v347
    %v353 = vmul.f32 1.0, %v352
    %v354 = vrcp.pop %v338
    %v355 = vmul.f32 %v338, %v354
    %v356 = vsub.f32 1.0, %v355
    %v357 = vmul.f32 %v354, %v356
    %v358 = vadd.f32 %v354, %v357
    %vm359 = vweird.f32 %v338
    %vm360 = vweird.f32 %v354
    %vm361 = vmor %vm359, %vm360
    %v362 = vsel %vm361, %v354, %v358
    %v363 = vand.u32 2147483647, %v338
    %vm364 = vcmp.eq.f32.partialorder %v363, 8.507059e+37
    %v365 = vand.u32 %v338, 2147483648
    %v366 = vor.u32 1.1754944e-38, %v365
    %v367 = vsel %vm364, %v366, %v362
    %v368 = vmul.f32 1.0, %v367
    %v369 = vtanh.pop %v329
    %v370 = vtanh.pop %v330
    %v371 = vmul.f32 %v353, %v270
    %v372 = vmul.f32 %v368, %v271
    %375 = vrot.lane.b32.xlu0 %v369, 64
    %v376 = vpop.permute.xlu0 %375
    %377 = vrot.lane.b32.xlu0 %v370, 64
    %v378 = vpop.permute.xlu0 %377
    %v381 = vmul.f32 %v353, %v376
    %v382 = vmul.f32 %v368, %v378
    %385 = vrot.lane.b32.xlu0 %v381, 32
    %v386 = vpop.permute.xlu0 %385
    %387 = vrot.lane.b32.xlu0 %v382, 32
    %v388 = vpop.permute.xlu0 %387
    %v391 = vadd.f32 %v371, %v386
    %v392 = vadd.f32 %v372, %v388
    %v393 = vtanh.pop %v391
    %v394 = vtanh.pop %v392
    %397 = vrot.lane.b32.xlu0 %v393, 64
    %v398 = vpop.permute.xlu0 %397
    %399 = vrot.lane.b32.xlu0 %v394, 64
    %v400 = vpop.permute.xlu0 %399
    %v403 = vmul.f32 %v353, %v398
    %v404 = vmul.f32 %v368, %v400
    %407 = vrot.lane.b32.xlu0 %v403, 32
    %v408 = vpop.permute.xlu0 %407
    %409 = vrot.lane.b32.xlu0 %v404, 32
    %v410 = vpop.permute.xlu0 %409
    %413 = vst.msk [vmem:[#allocation5 + $0x1] sm:$0x1] %vm292, %v408
    %414 = vst.msk [vmem:[#allocation5 + $0x9] sm:$0x1] %vm292, %v410
    %v415 = vld [vmem:[#allocation4 + $0x2] sm:$0x1]
    %v416 = vld [vmem:[#allocation4 + $0xa] sm:$0x1]
    %v417 = vpack.c.bf16 %v403, %v403
    %v418 = vpack.c.bf16 %v404, %v404
    %v421 = vunpack.c.l.b16 %v417
    %v422 = vunpack.c.l.b16 %v418
    %v423 = vrot.slane %v422, 7
    %v424 = vsel %vm304, %v423, %v421
    %v425 = vpack.c.b16 %v424, %v424
    %426 = vrot.lane.b32.xlu0 %v425, 32
    %v427 = vpop.permute.xlu0 %426
    %v429 = vsel %vm139, %v427, 0
    %431 = vmatpush.bf16.msra.mxu0 0
    %432 = vmatpush.bf16.msra.mxu0 0
    %433 = vmatpush.bf16.msra.mxu0 0
    %434 = vmatpush.bf16.msra.mxu0 0
    %435 = vmatpush.bf16.msra.mxu0 0
    %436 = vmatpush.bf16.msra.mxu0 0
    %437 = vmatpush.bf16.msra.mxu0 %v177
    %438 = vmatpush.bf16.msra.mxu0 %v176
    %439 = vmatmul.bf16.gmra.mxu0 %v429
    %v440 = vpop.f32.mrf.mxu0
    %v441 = vadd.f32 0.0, %v440
    %v442 = vpop.f32.mrf.mxu0
    %443 = vdwg.mxu0
    %v445 = vrot.slane %v441, 1
    %v448 = vadd.f32 %v415, %v441
    %v449 = vadd.f32 %v416, %v445
    %v450 = vxor.u32 %v448, 2147483648
    %v451 = vxor.u32 %v449, 2147483648
    %v452 = vmul.f32 %v450, 1.442695
    %v453 = vpow.pop %v452
    %v454 = vmul.f32 %v451, 1.442695
    %v455 = vpow.pop %v454
    %v456 = vadd.f32 %v453, 1.0
    %v457 = vadd.f32 %v455, 1.0
    %v458 = vrcp.pop %v456
    %v459 = vmul.f32 %v456, %v458
    %v460 = vsub.f32 1.0, %v459
    %v461 = vmul.f32 %v458, %v460
    %v462 = vadd.f32 %v458, %v461
    %vm463 = vweird.f32 %v456
    %vm464 = vweird.f32 %v458
    %vm465 = vmor %vm463, %vm464
    %v466 = vsel %vm465, %v458, %v462
    %v467 = vand.u32 2147483647, %v456
    %vm468 = vcmp.eq.f32.partialorder %v467, 8.507059e+37
    %v469 = vand.u32 %v456, 2147483648
    %v470 = vor.u32 1.1754944e-38, %v469
    %v471 = vsel %vm468, %v470, %v466
    %v472 = vmul.f32 1.0, %v471
    %v473 = vrcp.pop %v457
    %v474 = vmul.f32 %v457, %v473
    %v475 = vsub.f32 1.0, %v474
    %v476 = vmul.f32 %v473, %v475
    %v477 = vadd.f32 %v473, %v476
    %vm478 = vweird.f32 %v457
    %vm479 = vweird.f32 %v473
    %vm480 = vmor %vm478, %vm479
    %v481 = vsel %vm480, %v473, %v477
    %v482 = vand.u32 2147483647, %v457
    %vm483 = vcmp.eq.f32.partialorder %v482, 8.507059e+37
    %v484 = vand.u32 %v457, 2147483648
    %v485 = vor.u32 1.1754944e-38, %v484
    %v486 = vsel %vm483, %v485, %v481
    %v487 = vmul.f32 1.0, %v486
    %v488 = vtanh.pop %v448
    %v489 = vtanh.pop %v449
    %v490 = vmul.f32 %v472, %v391
    %v491 = vmul.f32 %v487, %v392
    %494 = vrot.lane.b32.xlu0 %v488, 64
    %v495 = vpop.permute.xlu0 %494
    %496 = vrot.lane.b32.xlu0 %v489, 64
    %v497 = vpop.permute.xlu0 %496
    %v500 = vmul.f32 %v472, %v495
    %v501 = vmul.f32 %v487, %v497
    %504 = vrot.lane.b32.xlu0 %v500, 32
    %v505 = vpop.permute.xlu0 %504
    %506 = vrot.lane.b32.xlu0 %v501, 32
    %v507 = vpop.permute.xlu0 %506
    %v510 = vadd.f32 %v490, %v505
    %v511 = vadd.f32 %v491, %v507
    %v512 = vtanh.pop %v510
    %v513 = vtanh.pop %v511
    %516 = vrot.lane.b32.xlu0 %v512, 64
    %v517 = vpop.permute.xlu0 %516
    %518 = vrot.lane.b32.xlu0 %v513, 64
    %v519 = vpop.permute.xlu0 %518
    %v522 = vmul.f32 %v472, %v517
    %v523 = vmul.f32 %v487, %v519
    %526 = vrot.lane.b32.xlu0 %v522, 32
    %v527 = vpop.permute.xlu0 %526
    %528 = vrot.lane.b32.xlu0 %v523, 32
    %v529 = vpop.permute.xlu0 %528
    %532 = vst.msk [vmem:[#allocation5 + $0x2] sm:$0x1] %vm292, %v527
    %533 = vst.msk [vmem:[#allocation5 + $0xa] sm:$0x1] %vm292, %v529
    %v534 = vld [vmem:[#allocation4 + $0x3] sm:$0x1]
    %v535 = vld [vmem:[#allocation4 + $0xb] sm:$0x1]
    %v536 = vpack.c.bf16 %v522, %v522
    %v537 = vpack.c.bf16 %v523, %v523
    %v540 = vunpack.c.l.b16 %v536
    %v541 = vunpack.c.l.b16 %v537
    %v542 = vrot.slane %v541, 7
    %v543 = vsel %vm304, %v542, %v540
    %v544 = vpack.c.b16 %v543, %v543
    %545 = vrot.lane.b32.xlu0 %v544, 32
    %v546 = vpop.permute.xlu0 %545
    %v548 = vsel %vm139, %v546, 0
    %550 = vmatpush.bf16.msra.mxu0 0
    %551 = vmatpush.bf16.msra.mxu0 0
    %552 = vmatpush.bf16.msra.mxu0 0
    %553 = vmatpush.bf16.msra.mxu0 0
    %554 = vmatpush.bf16.msra.mxu0 0
    %555 = vmatpush.bf16.msra.mxu0 0
    %556 = vmatpush.bf16.msra.mxu0 %v177
    %557 = vmatpush.bf16.msra.mxu0 %v176
    %558 = vmatmul.bf16.gmra.mxu0 %v548
    %v559 = vpop.f32.mrf.mxu0
    %v560 = vadd.f32 0.0, %v559
    %v561 = vpop.f32.mrf.mxu0
    %562 = vdwg.mxu0
    %v564 = vrot.slane %v560, 1
    %v567 = vadd.f32 %v534, %v560
    %v568 = vadd.f32 %v535, %v564
    %v569 = vxor.u32 %v567, 2147483648
    %v570 = vxor.u32 %v568, 2147483648
    %v571 = vmul.f32 %v569, 1.442695
    %v572 = vpow.pop %v571
    %v573 = vmul.f32 %v570, 1.442695
    %v574 = vpow.pop %v573
    %v575 = vadd.f32 %v572, 1.0
    %v576 = vadd.f32 %v574, 1.0
    %v577 = vrcp.pop %v575
    %v578 = vmul.f32 %v575, %v577
    %v579 = vsub.f32 1.0, %v578
    %v580 = vmul.f32 %v577, %v579
    %v581 = vadd.f32 %v577, %v580
    %vm582 = vweird.f32 %v575
    %vm583 = vweird.f32 %v577
    %vm584 = vmor %vm582, %vm583
    %v585 = vsel %vm584, %v577, %v581
    %v586 = vand.u32 2147483647, %v575
    %vm587 = vcmp.eq.f32.partialorder %v586, 8.507059e+37
    %v588 = vand.u32 %v575, 2147483648
    %v589 = vor.u32 1.1754944e-38, %v588
    %v590 = vsel %vm587, %v589, %v585
    %v591 = vmul.f32 1.0, %v590
    %v592 = vrcp.pop %v576
    %v593 = vmul.f32 %v576, %v592
    %v594 = vsub.f32 1.0, %v593
    %v595 = vmul.f32 %v592, %v594
    %v596 = vadd.f32 %v592, %v595
    %vm597 = vweird.f32 %v576
    %vm598 = vweird.f32 %v592
    %vm599 = vmor %vm597, %vm598
    %v600 = vsel %vm599, %v592, %v596
    %v601 = vand.u32 2147483647, %v576
    %vm602 = vcmp.eq.f32.partialorder %v601, 8.507059e+37
    %v603 = vand.u32 %v576, 2147483648
    %v604 = vor.u32 1.1754944e-38, %v603
    %v605 = vsel %vm602, %v604, %v600
    %v606 = vmul.f32 1.0, %v605
    %v607 = vtanh.pop %v567
    %v608 = vtanh.pop %v568
    %v609 = vmul.f32 %v591, %v510
    %v610 = vmul.f32 %v606, %v511
    %613 = vrot.lane.b32.xlu0 %v607, 64
    %v614 = vpop.permute.xlu0 %613
    %615 = vrot.lane.b32.xlu0 %v608, 64
    %v616 = vpop.permute.xlu0 %615
    %v619 = vmul.f32 %v591, %v614
    %v620 = vmul.f32 %v606, %v616
    %623 = vrot.lane.b32.xlu0 %v619, 32
    %v624 = vpop.permute.xlu0 %623
    %625 = vrot.lane.b32.xlu0 %v620, 32
    %v626 = vpop.permute.xlu0 %625
    %v629 = vadd.f32 %v609, %v624
    %v630 = vadd.f32 %v610, %v626
    %v631 = vtanh.pop %v629
    %v632 = vtanh.pop %v630
    %635 = vrot.lane.b32.xlu0 %v631, 64
    %v636 = vpop.permute.xlu0 %635
    %637 = vrot.lane.b32.xlu0 %v632, 64
    %v638 = vpop.permute.xlu0 %637
    %v641 = vmul.f32 %v591, %v636
    %v642 = vmul.f32 %v606, %v638
    %645 = vrot.lane.b32.xlu0 %v641, 32
    %v646 = vpop.permute.xlu0 %645
    %647 = vrot.lane.b32.xlu0 %v642, 32
    %v648 = vpop.permute.xlu0 %647
    %651 = vst.msk [vmem:[#allocation5 + $0x3] sm:$0x1] %vm292, %v646
    %652 = vst.msk [vmem:[#allocation5 + $0xb] sm:$0x1] %vm292, %v648
    %v653 = vld [vmem:[#allocation4 + $0x4] sm:$0x1]
    %v654 = vld [vmem:[#allocation4 + $0xc] sm:$0x1]
    %v655 = vpack.c.bf16 %v641, %v641
    %v656 = vpack.c.bf16 %v642, %v642
    %v659 = vunpack.c.l.b16 %v655
    %v660 = vunpack.c.l.b16 %v656
    %v661 = vrot.slane %v660, 7
    %v662 = vsel %vm304, %v661, %v659
    %v663 = vpack.c.b16 %v662, %v662
    %664 = vrot.lane.b32.xlu0 %v663, 32
    %v665 = vpop.permute.xlu0 %664
    %v667 = vsel %vm139, %v665, 0
    %669 = vmatpush.bf16.msra.mxu0 0
    %670 = vmatpush.bf16.msra.mxu0 0
    %671 = vmatpush.bf16.msra.mxu0 0
    %672 = vmatpush.bf16.msra.mxu0 0
    %673 = vmatpush.bf16.msra.mxu0 0
    %674 = vmatpush.bf16.msra.mxu0 0
    %675 = vmatpush.bf16.msra.mxu0 %v177
    %676 = vmatpush.bf16.msra.mxu0 %v176
    %677 = vmatmul.bf16.gmra.mxu0 %v667
    %v678 = vpop.f32.mrf.mxu0
    %v679 = vadd.f32 0.0, %v678
    %v680 = vpop.f32.mrf.mxu0
    %681 = vdwg.mxu0
    %v683 = vrot.slane %v679, 1
    %v686 = vadd.f32 %v653, %v679
    %v687 = vadd.f32 %v654, %v683
    %v688 = vxor.u32 %v686, 2147483648
    %v689 = vxor.u32 %v687, 2147483648
    %v690 = vmul.f32 %v688, 1.442695
    %v691 = vpow.pop %v690
    %v692 = vmul.f32 %v689, 1.442695
    %v693 = vpow.pop %v692
    %v694 = vadd.f32 %v691, 1.0
    %v695 = vadd.f32 %v693, 1.0
    %v696 = vrcp.pop %v694
    %v697 = vmul.f32 %v694, %v696
    %v698 = vsub.f32 1.0, %v697
    %v699 = vmul.f32 %v696, %v698
    %v700 = vadd.f32 %v696, %v699
    %vm701 = vweird.f32 %v694
    %vm702 = vweird.f32 %v696
    %vm703 = vmor %vm701, %vm702
    %v704 = vsel %vm703, %v696, %v700
    %v705 = vand.u32 2147483647, %v694
    %vm706 = vcmp.eq.f32.partialorder %v705, 8.507059e+37
    %v707 = vand.u32 %v694, 2147483648
    %v708 = vor.u32 1.1754944e-38, %v707
    %v709 = vsel %vm706, %v708, %v704
    %v710 = vmul.f32 1.0, %v709
    %v711 = vrcp.pop %v695
    %v712 = vmul.f32 %v695, %v711
    %v713 = vsub.f32 1.0, %v712
    %v714 = vmul.f32 %v711, %v713
    %v715 = vadd.f32 %v711, %v714
    %vm716 = vweird.f32 %v695
    %vm717 = vweird.f32 %v711
    %vm718 = vmor %vm716, %vm717
    %v719 = vsel %vm718, %v711, %v715
    %v720 = vand.u32 2147483647, %v695
    %vm721 = vcmp.eq.f32.partialorder %v720, 8.507059e+37
    %v722 = vand.u32 %v695, 2147483648
    %v723 = vor.u32 1.1754944e-38, %v722
    %v724 = vsel %vm721, %v723, %v719
    %v725 = vmul.f32 1.0, %v724
    %v726 = vtanh.pop %v686
    %v727 = vtanh.pop %v687
    %v728 = vmul.f32 %v710, %v629
    %v729 = vmul.f32 %v725, %v630
    %732 = vrot.lane.b32.xlu0 %v726, 64
    %v733 = vpop.permute.xlu0 %732
    %734 = vrot.lane.b32.xlu0 %v727, 64
    %v735 = vpop.permute.xlu0 %734
    %v738 = vmul.f32 %v710, %v733
    %v739 = vmul.f32 %v725, %v735
    %742 = vrot.lane.b32.xlu0 %v738, 32
    %v743 = vpop.permute.xlu0 %742
    %744 = vrot.lane.b32.xlu0 %v739, 32
    %v745 = vpop.permute.xlu0 %744
    %v748 = vadd.f32 %v728, %v743
    %v749 = vadd.f32 %v729, %v745
    %v750 = vtanh.pop %v748
    %v751 = vtanh.pop %v749
    %754 = vrot.lane.b32.xlu0 %v750, 64
    %v755 = vpop.permute.xlu0 %754
    %756 = vrot.lane.b32.xlu0 %v751, 64
    %v757 = vpop.permute.xlu0 %756
    %v760 = vmul.f32 %v710, %v755
    %v761 = vmul.f32 %v725, %v757
    %764 = vrot.lane.b32.xlu0 %v760, 32
    %v765 = vpop.permute.xlu0 %764
    %766 = vrot.lane.b32.xlu0 %v761, 32
    %v767 = vpop.permute.xlu0 %766
    %770 = vst.msk [vmem:[#allocation5 + $0x4] sm:$0x1] %vm292, %v765
    %771 = vst.msk [vmem:[#allocation5 + $0xc] sm:$0x1] %vm292, %v767
    %v772 = vld [vmem:[#allocation4 + $0x5] sm:$0x1]
    %v773 = vld [vmem:[#allocation4 + $0xd] sm:$0x1]
    %v774 = vpack.c.bf16 %v760, %v760
    %v775 = vpack.c.bf16 %v761, %v761
    %v778 = vunpack.c.l.b16 %v774
    %v779 = vunpack.c.l.b16 %v775
    %v780 = vrot.slane %v779, 7
    %v781 = vsel %vm304, %v780, %v778
    %v782 = vpack.c.b16 %v781, %v781
    %783 = vrot.lane.b32.xlu0 %v782, 32
    %v784 = vpop.permute.xlu0 %783
    %v786 = vsel %vm139, %v784, 0
    %788 = vmatpush.bf16.msra.mxu0 0
    %789 = vmatpush.bf16.msra.mxu0 0
    %790 = vmatpush.bf16.msra.mxu0 0
    %791 = vmatpush.bf16.msra.mxu0 0
    %792 = vmatpush.bf16.msra.mxu0 0
    %793 = vmatpush.bf16.msra.mxu0 0
    %794 = vmatpush.bf16.msra.mxu0 %v177
    %795 = vmatpush.bf16.msra.mxu0 %v176
    %796 = vmatmul.bf16.gmra.mxu0 %v786
    %v797 = vpop.f32.mrf.mxu0
    %v798 = vadd.f32 0.0, %v797
    %v799 = vpop.f32.mrf.mxu0
    %800 = vdwg.mxu0
    %v802 = vrot.slane %v798, 1
    %v805 = vadd.f32 %v772, %v798
    %v806 = vadd.f32 %v773, %v802
    %v807 = vxor.u32 %v805, 2147483648
    %v808 = vxor.u32 %v806, 2147483648
    %v809 = vmul.f32 %v807, 1.442695
    %v810 = vpow.pop %v809
    %v811 = vmul.f32 %v808, 1.442695
    %v812 = vpow.pop %v811
    %v813 = vadd.f32 %v810, 1.0
    %v814 = vadd.f32 %v812, 1.0
    %v815 = vrcp.pop %v813
    %v816 = vmul.f32 %v813, %v815
    %v817 = vsub.f32 1.0, %v816
    %v818 = vmul.f32 %v815, %v817
    %v819 = vadd.f32 %v815, %v818
    %vm820 = vweird.f32 %v813
    %vm821 = vweird.f32 %v815
    %vm822 = vmor %vm820, %vm821
    %v823 = vsel %vm822, %v815, %v819
    %v824 = vand.u32 2147483647, %v813
    %vm825 = vcmp.eq.f32.partialorder %v824, 8.507059e+37
    %v826 = vand.u32 %v813, 2147483648
    %v827 = vor.u32 1.1754944e-38, %v826
    %v828 = vsel %vm825, %v827, %v823
    %v829 = vmul.f32 1.0, %v828
    %v830 = vrcp.pop %v814
    %v831 = vmul.f32 %v814, %v830
    %v832 = vsub.f32 1.0, %v831
    %v833 = vmul.f32 %v830, %v832
    %v834 = vadd.f32 %v830, %v833
    %vm835 = vweird.f32 %v814
    %vm836 = vweird.f32 %v830
    %vm837 = vmor %vm835, %vm836
    %v838 = vsel %vm837, %v830, %v834
    %v839 = vand.u32 2147483647, %v814
    %vm840 = vcmp.eq.f32.partialorder %v839, 8.507059e+37
    %v841 = vand.u32 %v814, 2147483648
    %v842 = vor.u32 1.1754944e-38, %v841
    %v843 = vsel %vm840, %v842, %v838
    %v844 = vmul.f32 1.0, %v843
    %v845 = vtanh.pop %v805
    %v846 = vtanh.pop %v806
    %v847 = vmul.f32 %v829, %v748
    %v848 = vmul.f32 %v844, %v749
    %851 = vrot.lane.b32.xlu0 %v845, 64
    %v852 = vpop.permute.xlu0 %851
    %853 = vrot.lane.b32.xlu0 %v846, 64
    %v854 = vpop.permute.xlu0 %853
    %v857 = vmul.f32 %v829, %v852
    %v858 = vmul.f32 %v844, %v854
    %861 = vrot.lane.b32.xlu0 %v857, 32
    %v862 = vpop.permute.xlu0 %861
    %863 = vrot.lane.b32.xlu0 %v858, 32
    %v864 = vpop.permute.xlu0 %863
    %v867 = vadd.f32 %v847, %v862
    %v868 = vadd.f32 %v848, %v864
    %v869 = vtanh.pop %v867
    %v870 = vtanh.pop %v868
    %873 = vrot.lane.b32.xlu0 %v869, 64
    %v874 = vpop.permute.xlu0 %873
    %875 = vrot.lane.b32.xlu0 %v870, 64
    %v876 = vpop.permute.xlu0 %875
    %v879 = vmul.f32 %v829, %v874
    %v880 = vmul.f32 %v844, %v876
    %883 = vrot.lane.b32.xlu0 %v879, 32
    %v884 = vpop.permute.xlu0 %883
    %885 = vrot.lane.b32.xlu0 %v880, 32
    %v886 = vpop.permute.xlu0 %885
    %889 = vst.msk [vmem:[#allocation5 + $0x5] sm:$0x1] %vm292, %v884
    %890 = vst.msk [vmem:[#allocation5 + $0xd] sm:$0x1] %vm292, %v886
    %v891 = vld [vmem:[#allocation4 + $0x6] sm:$0x1]
    %v892 = vld [vmem:[#allocation4 + $0xe] sm:$0x1]
    %v893 = vpack.c.bf16 %v879, %v879
    %v894 = vpack.c.bf16 %v880, %v880
    %v897 = vunpack.c.l.b16 %v893
    %v898 = vunpack.c.l.b16 %v894
    %v899 = vrot.slane %v898, 7
    %v900 = vsel %vm304, %v899, %v897
    %v901 = vpack.c.b16 %v900, %v900
    %902 = vrot.lane.b32.xlu0 %v901, 32
    %v903 = vpop.permute.xlu0 %902
    %v905 = vsel %vm139, %v903, 0
    %907 = vmatpush.bf16.msra.mxu0 0
    %908 = vmatpush.bf16.msra.mxu0 0
    %909 = vmatpush.bf16.msra.mxu0 0
    %910 = vmatpush.bf16.msra.mxu0 0
    %911 = vmatpush.bf16.msra.mxu0 0
    %912 = vmatpush.bf16.msra.mxu0 0
    %913 = vmatpush.bf16.msra.mxu0 %v177
    %914 = vmatpush.bf16.msra.mxu0 %v176
    %915 = vmatmul.bf16.gmra.mxu0 %v905
    %v916 = vpop.f32.mrf.mxu0
    %v917 = vadd.f32 0.0, %v916
    %v918 = vpop.f32.mrf.mxu0
    %919 = vdwg.mxu0
    %v921 = vrot.slane %v917, 1
    %v924 = vadd.f32 %v891, %v917
    %v925 = vadd.f32 %v892, %v921
    %v926 = vxor.u32 %v924, 2147483648
    %v927 = vxor.u32 %v925, 2147483648
    %v928 = vmul.f32 %v926, 1.442695
    %v929 = vpow.pop %v928
    %v930 = vmul.f32 %v927, 1.442695
    %v931 = vpow.pop %v930
    %v932 = vadd.f32 %v929, 1.0
    %v933 = vadd.f32 %v931, 1.0
    %v934 = vrcp.pop %v932
    %v935 = vmul.f32 %v932, %v934
    %v936 = vsub.f32 1.0, %v935
    %v937 = vmul.f32 %v934, %v936
    %v938 = vadd.f32 %v934, %v937
    %vm939 = vweird.f32 %v932
    %vm940 = vweird.f32 %v934
    %vm941 = vmor %vm939, %vm940
    %v942 = vsel %vm941, %v934, %v938
    %v943 = vand.u32 2147483647, %v932
    %vm944 = vcmp.eq.f32.partialorder %v943, 8.507059e+37
    %v945 = vand.u32 %v932, 2147483648
    %v946 = vor.u32 1.1754944e-38, %v945
    %v947 = vsel %vm944, %v946, %v942
    %v948 = vmul.f32 1.0, %v947
    %v949 = vrcp.pop %v933
    %v950 = vmul.f32 %v933, %v949
    %v951 = vsub.f32 1.0, %v950
    %v952 = vmul.f32 %v949, %v951
    %v953 = vadd.f32 %v949, %v952
    %vm954 = vweird.f32 %v933
    %vm955 = vweird.f32 %v949
    %vm956 = vmor %vm954, %vm955
    %v957 = vsel %vm956, %v949, %v953
    %v958 = vand.u32 2147483647, %v933
    %vm959 = vcmp.eq.f32.partialorder %v958, 8.507059e+37
    %v960 = vand.u32 %v933, 2147483648
    %v961 = vor.u32 1.1754944e-38, %v960
    %v962 = vsel %vm959, %v961, %v957
    %v963 = vmul.f32 1.0, %v962
    %v964 = vtanh.pop %v924
    %v965 = vtanh.pop %v925
    %v966 = vmul.f32 %v948, %v867
    %v967 = vmul.f32 %v963, %v868
    %970 = vrot.lane.b32.xlu0 %v964, 64
    %v971 = vpop.permute.xlu0 %970
    %972 = vrot.lane.b32.xlu0 %v965, 64
    %v973 = vpop.permute.xlu0 %972
    %v976 = vmul.f32 %v948, %v971
    %v977 = vmul.f32 %v963, %v973
    %980 = vrot.lane.b32.xlu0 %v976, 32
    %v981 = vpop.permute.xlu0 %980
    %982 = vrot.lane.b32.xlu0 %v977, 32
    %v983 = vpop.permute.xlu0 %982
    %v986 = vadd.f32 %v966, %v981
    %v987 = vadd.f32 %v967, %v983
    %v988 = vtanh.pop %v986
    %v989 = vtanh.pop %v987
    %992 = vrot.lane.b32.xlu0 %v988, 64
    %v993 = vpop.permute.xlu0 %992
    %994 = vrot.lane.b32.xlu0 %v989, 64
    %v995 = vpop.permute.xlu0 %994
    %v998 = vmul.f32 %v948, %v993
    %v999 = vmul.f32 %v963, %v995
    %1002 = vrot.lane.b32.xlu0 %v998, 32
    %v1003 = vpop.permute.xlu0 %1002
    %1004 = vrot.lane.b32.xlu0 %v999, 32
    %v1005 = vpop.permute.xlu0 %1004
    %1008 = vst.msk [vmem:[#allocation5 + $0x6] sm:$0x1] %vm292, %v1003
    %1009 = vst.msk [vmem:[#allocation5 + $0xe] sm:$0x1] %vm292, %v1005
    %v1010 = vld [vmem:[#allocation4 + $0x7] sm:$0x1]
    %v1011 = vld [vmem:[#allocation4 + $0xf] sm:$0x1]
    %v1012 = vpack.c.bf16 %v998, %v998
    %v1013 = vpack.c.bf16 %v999, %v999
    %v1016 = vunpack.c.l.b16 %v1012
    %v1017 = vunpack.c.l.b16 %v1013
    %v1018 = vrot.slane %v1017, 7
    %v1019 = vsel %vm304, %v1018, %v1016
    %v1020 = vpack.c.b16 %v1019, %v1019
    %1021 = vrot.lane.b32.xlu0 %v1020, 32
    %v1022 = vpop.permute.xlu0 %1021
    %v1024 = vsel %vm139, %v1022, 0
    %1026 = vmatpush.bf16.msra.mxu0 0
    %1027 = vmatpush.bf16.msra.mxu0 0
    %1028 = vmatpush.bf16.msra.mxu0 0
    %1029 = vmatpush.bf16.msra.mxu0 0
    %1030 = vmatpush.bf16.msra.mxu0 0
    %1031 = vmatpush.bf16.msra.mxu0 0
    %1032 = vmatpush.bf16.msra.mxu0 %v177
    %1033 = vmatpush.bf16.msra.mxu0 %v176
    %1034 = vmatmul.bf16.gmra.mxu0 %v1024
    %v1035 = vpop.f32.mrf.mxu0
    %v1036 = vadd.f32 0.0, %v1035
    %v1037 = vpop.f32.mrf.mxu0
    %1038 = vdwg.mxu0
    %v1040 = vrot.slane %v1036, 1
    %v1043 = vadd.f32 %v1010, %v1036
    %v1044 = vadd.f32 %v1011, %v1040
    %v1045 = vxor.u32 %v1043, 2147483648
    %v1046 = vxor.u32 %v1044, 2147483648
    %v1047 = vmul.f32 %v1045, 1.442695
    %v1048 = vpow.pop %v1047
    %v1049 = vmul.f32 %v1046, 1.442695
    %v1050 = vpow.pop %v1049
    %v1051 = vadd.f32 %v1048, 1.0
    %v1052 = vadd.f32 %v1050, 1.0
    %v1053 = vrcp.pop %v1051
    %v1054 = vmul.f32 %v1051, %v1053
    %v1055 = vsub.f32 1.0, %v1054
    %v1056 = vmul.f32 %v1053, %v1055
    %v1057 = vadd.f32 %v1053, %v1056
    %vm1058 = vweird.f32 %v1051
    %vm1059 = vweird.f32 %v1053
    %vm1060 = vmor %vm1058, %vm1059
    %v1061 = vsel %vm1060, %v1053, %v1057
    %v1062 = vand.u32 2147483647, %v1051
    %vm1063 = vcmp.eq.f32.partialorder %v1062, 8.507059e+37
    %v1064 = vand.u32 %v1051, 2147483648
    %v1065 = vor.u32 1.1754944e-38, %v1064
    %v1066 = vsel %vm1063, %v1065, %v1061
    %v1067 = vmul.f32 1.0, %v1066
    %v1068 = vrcp.pop %v1052
    %v1069 = vmul.f32 %v1052, %v1068
    %v1070 = vsub.f32 1.0, %v1069
    %v1071 = vmul.f32 %v1068, %v1070
    %v1072 = vadd.f32 %v1068, %v1071
    %vm1073 = vweird.f32 %v1052
    %vm1074 = vweird.f32 %v1068
    %vm1075 = vmor %vm1073, %vm1074
    %v1076 = vsel %vm1075, %v1068, %v1072
    %v1077 = vand.u32 2147483647, %v1052
    %vm1078 = vcmp.eq.f32.partialorder %v1077, 8.507059e+37
    %v1079 = vand.u32 %v1052, 2147483648
    %v1080 = vor.u32 1.1754944e-38, %v1079
    %v1081 = vsel %vm1078, %v1080, %v1076
    %v1082 = vmul.f32 1.0, %v1081
    %v1083 = vtanh.pop %v1043
    %v1084 = vtanh.pop %v1044
    %v1085 = vmul.f32 %v1067, %v986
    %v1086 = vmul.f32 %v1082, %v987
    %1089 = vrot.lane.b32.xlu0 %v1083, 64
    %v1090 = vpop.permute.xlu0 %1089
    %1091 = vrot.lane.b32.xlu0 %v1084, 64
    %v1092 = vpop.permute.xlu0 %1091
    %v1095 = vmul.f32 %v1067, %v1090
    %v1096 = vmul.f32 %v1082, %v1092
    %1099 = vrot.lane.b32.xlu0 %v1095, 32
    %v1100 = vpop.permute.xlu0 %1099
    %1101 = vrot.lane.b32.xlu0 %v1096, 32
    %v1102 = vpop.permute.xlu0 %1101
    %v1105 = vadd.f32 %v1085, %v1100
    %v1106 = vadd.f32 %v1086, %v1102
    %v1107 = vtanh.pop %v1105
    %v1108 = vtanh.pop %v1106
    %1111 = vrot.lane.b32.xlu0 %v1107, 64
    %v1112 = vpop.permute.xlu0 %1111
    %1113 = vrot.lane.b32.xlu0 %v1108, 64
    %v1114 = vpop.permute.xlu0 %1113
    %v1117 = vmul.f32 %v1067, %v1112
    %v1118 = vmul.f32 %v1082, %v1114
    %1121 = vrot.lane.b32.xlu0 %v1117, 32
    %v1122 = vpop.permute.xlu0 %1121
    %1123 = vrot.lane.b32.xlu0 %v1118, 32
    %v1124 = vpop.permute.xlu0 %1123
    %1127 = vst.msk [vmem:[#allocation5 + $0x7] sm:$0x1] %vm292, %v1122
    %1128 = vst.msk [vmem:[#allocation5 + $0xf] sm:$0x1] %vm292, %v1124
    %v1129 = vrot.slane %v1118, 7
    %v1130 = vsel %vm304, %v1129, %v1117
    %1131 = vrot.lane.b32.xlu0 %v1130, 32
    %v1132 = vpop.permute.xlu0 %1131
    %vm1134 = vcmask 254976
    %1135 = vst.msk [vmem:[#allocation2] sm:$0x3] %vm1134, %v1132
    %v1138 = vrot.slane %v1106, 7
    %v1139 = vsel %vm304, %v1138, %v1105
    %1140 = vrot.lane.b32.xlu0 %v1139, 96
    %v1141 = vpop.permute.xlu0 %1140
    %1143 = vst.msk [vmem:[#allocation3] sm:$0x3] %vm1134, %v1141
    %v1144 = vld [vmem:[#allocation5] sm:$0xff]
    %v1145 = vld [vmem:[#allocation5 + $0x8] sm:$0xff]
    %v1146 = vpack.c.bf16 %v1145, %v1144
    %v1147 = vld [vmem:[#allocation14] sm:$0xf]
    %v1148 = vld [vmem:[#allocation14 + $0x4] sm:$0xf]
    %v1149 = vld [vmem:[#allocation14 + $0x8] sm:$0xf]
    %v1150 = vld [vmem:[#allocation14 + $0xc] sm:$0xf]
    %v1151 = vld [vmem:[%s5] sm:$0x1]
    %v1153 = vperm.slane %v1151, 0
    %v1159 = vunpack.c.l.b16 %v1147
    %v1160 = vunpack.c.l.b16 %v1148
    %v1161 = vunpack.c.l.b16 %v1149
    %v1162 = vunpack.c.l.b16 %v1150
    %v1163 = vpack.c.b16 %v1160, %v1159
    %v1164 = vpack.c.b16 %v1162, %v1161
    %v1168 = vsel %vm139, %v1146, 0
    %1170 = vmatpush.bf16.msra.mxu0 0
    %1171 = vmatpush.bf16.msra.mxu0 0
    %1172 = vmatpush.bf16.msra.mxu0 0
    %1173 = vmatpush.bf16.msra.mxu0 0
    %1174 = vmatpush.bf16.msra.mxu0 0
    %1175 = vmatpush.bf16.msra.mxu0 0
    %1176 = vmatpush.bf16.msra.mxu0 %v1164
    %1177 = vmatpush.bf16.msra.mxu0 %v1163
    %1178 = vmatmul.bf16.gmra.mxu0 %v1168
    %v1179 = vpop.f32.mrf.mxu0
    %v1180 = vadd.f32 %v1153, %v1179
    %v1181 = vpop.f32.mrf.mxu0
    %v1182 = vadd.f32 %v1153, %v1181
    %1183 = vdwg.mxu0
    %1184 = vst [vmem:[#allocation4] sm:$0xff] %v1180
    %1185 = vst [vmem:[#allocation4 + $0x8] sm:$0xff] %v1182
    %s1186 = scalar_lea.vmem [#allocation12], 16
    %v1187 = vld [vmem:[%s1186] sm:$0xf]
    %v1188 = vld [vmem:[%s1186 + $0x4] sm:$0xf]
    %v1189 = vld [vmem:[%s1186 + $0x8] sm:$0xf]
    %v1190 = vld [vmem:[%s1186 + $0xc] sm:$0xf]
    %s1191 = scalar_lea.vmem [#allocation2], 2
    %v1192 = vld [vmem:[%s1191] sm:$0x3]
    %s1193 = scalar_lea.vmem [#allocation3], 2
    %v1194 = vld [vmem:[%s1193] sm:$0x3]
    %v1195 = vld [vmem:[#allocation4] sm:$0x1]
    %v1196 = vld [vmem:[#allocation4 + $0x8] sm:$0x1]
    %v1197 = vpack.c.bf16 %v1192, %v1192
    %v1202 = vunpack.c.l.b16 %v1187
    %v1203 = vunpack.c.l.b16 %v1188
    %v1204 = vunpack.c.l.b16 %v1189
    %v1205 = vunpack.c.l.b16 %v1190
    %v1206 = vpack.c.b16 %v1203, %v1202
    %v1207 = vpack.c.b16 %v1205, %v1204
    %v1211 = vsel %vm139, %v1197, 0
    %1213 = vmatpush.bf16.msra.mxu0 0
    %1214 = vmatpush.bf16.msra.mxu0 0
    %1215 = vmatpush.bf16.msra.mxu0 0
    %1216 = vmatpush.bf16.msra.mxu0 0
    %1217 = vmatpush.bf16.msra.mxu0 0
    %1218 = vmatpush.bf16.msra.mxu0 0
    %1219 = vmatpush.bf16.msra.mxu0 %v1207
    %1220 = vmatpush.bf16.msra.mxu0 %v1206
    %1221 = vmatmul.bf16.gmra.mxu0 %v1211
    %v1222 = vpop.f32.mrf.mxu0
    %v1223 = vadd.f32 0.0, %v1222
    %v1224 = vpop.f32.mrf.mxu0
    %1225 = vdwg.mxu0
    %v1227 = vrot.slane %v1223, 1
    %v1230 = vadd.f32 %v1195, %v1223
    %v1231 = vadd.f32 %v1196, %v1227
    %v1232 = vxor.u32 %v1230, 2147483648
    %v1233 = vxor.u32 %v1231, 2147483648
    %v1234 = vmul.f32 %v1232, 1.442695
    %v1235 = vpow.pop %v1234
    %v1236 = vmul.f32 %v1233, 1.442695
    %v1237 = vpow.pop %v1236
    %v1238 = vadd.f32 %v1235, 1.0
    %v1239 = vadd.f32 %v1237, 1.0
    %v1240 = vrcp.pop %v1238
    %v1241 = vmul.f32 %v1238, %v1240
    %v1242 = vsub.f32 1.0, %v1241
    %v1243 = vmul.f32 %v1240, %v1242
    %v1244 = vadd.f32 %v1240, %v1243
    %vm1245 = vweird.f32 %v1238
    %vm1246 = vweird.f32 %v1240
    %vm1247 = vmor %vm1245, %vm1246
    %v1248 = vsel %vm1247, %v1240, %v1244
    %v1249 = vand.u32 2147483647, %v1238
    %vm1250 = vcmp.eq.f32.partialorder %v1249, 8.507059e+37
    %v1251 = vand.u32 %v1238, 2147483648
    %v1252 = vor.u32 1.1754944e-38, %v1251
    %v1253 = vsel %vm1250, %v1252, %v1248
    %v1254 = vmul.f32 1.0, %v1253
    %v1255 = vrcp.pop %v1239
    %v1256 = vmul.f32 %v1239, %v1255
    %v1257 = vsub.f32 1.0, %v1256
    %v1258 = vmul.f32 %v1255, %v1257
    %v1259 = vadd.f32 %v1255, %v1258
    %vm1260 = vweird.f32 %v1239
    %vm1261 = vweird.f32 %v1255
    %vm1262 = vmor %vm1260, %vm1261
    %v1263 = vsel %vm1262, %v1255, %v1259
    %v1264 = vand.u32 2147483647, %v1239
    %vm1265 = vcmp.eq.f32.partialorder %v1264, 8.507059e+37
    %v1266 = vand.u32 %v1239, 2147483648
    %v1267 = vor.u32 1.1754944e-38, %v1266
    %v1268 = vsel %vm1265, %v1267, %v1263
    %v1269 = vmul.f32 1.0, %v1268
    %v1270 = vtanh.pop %v1230
    %v1271 = vtanh.pop %v1231
    %v1273 = vrot.slane %v1194, 1
    %1274 = vrot.lane.b32.xlu0 %v1194, 32
    %v1275 = vpop.permute.xlu0 %1274
    %1276 = vrot.lane.b32.xlu0 %v1273, 32
    %v1277 = vpop.permute.xlu0 %1276
    %v1280 = vmul.f32 %v1254, %v1275
    %v1281 = vmul.f32 %v1269, %v1277
    %1284 = vrot.lane.b32.xlu0 %v1270, 64
    %v1285 = vpop.permute.xlu0 %1284
    %1286 = vrot.lane.b32.xlu0 %v1271, 64
    %v1287 = vpop.permute.xlu0 %1286
    %v1290 = vmul.f32 %v1254, %v1285
    %v1291 = vmul.f32 %v1269, %v1287
    %1294 = vrot.lane.b32.xlu0 %v1290, 32
    %v1295 = vpop.permute.xlu0 %1294
    %1296 = vrot.lane.b32.xlu0 %v1291, 32
    %v1297 = vpop.permute.xlu0 %1296
    %v1300 = vadd.f32 %v1280, %v1295
    %v1301 = vadd.f32 %v1281, %v1297
    %v1302 = vtanh.pop %v1300
    %v1303 = vtanh.pop %v1301
    %1306 = vrot.lane.b32.xlu0 %v1302, 64
    %v1307 = vpop.permute.xlu0 %1306
    %1308 = vrot.lane.b32.xlu0 %v1303, 64
    %v1309 = vpop.permute.xlu0 %1308
    %v1312 = vmul.f32 %v1254, %v1307
    %v1313 = vmul.f32 %v1269, %v1309
    %1316 = vrot.lane.b32.xlu0 %v1312, 32
    %v1317 = vpop.permute.xlu0 %1316
    %1318 = vrot.lane.b32.xlu0 %v1313, 32
    %v1319 = vpop.permute.xlu0 %1318
    %1322 = vst.msk [vmem:[#allocation5] sm:$0x1] %vm292, %v1317
    %1323 = vst.msk [vmem:[#allocation5 + $0x8] sm:$0x1] %vm292, %v1319
    %v1324 = vld [vmem:[#allocation4 + $0x1] sm:$0x1]
    %v1325 = vld [vmem:[#allocation4 + $0x9] sm:$0x1]
    %v1326 = vpack.c.bf16 %v1312, %v1312
    %v1327 = vpack.c.bf16 %v1313, %v1313
    %v1330 = vunpack.c.l.b16 %v1326
    %v1331 = vunpack.c.l.b16 %v1327
    %v1332 = vrot.slane %v1331, 7
    %v1333 = vsel %vm304, %v1332, %v1330
    %v1334 = vpack.c.b16 %v1333, %v1333
    %1335 = vrot.lane.b32.xlu0 %v1334, 32
    %v1336 = vpop.permute.xlu0 %1335
    %v1338 = vsel %vm139, %v1336, 0
    %1340 = vmatpush.bf16.msra.mxu0 0
    %1341 = vmatpush.bf16.msra.mxu0 0
    %1342 = vmatpush.bf16.msra.mxu0 0
    %1343 = vmatpush.bf16.msra.mxu0 0
    %1344 = vmatpush.bf16.msra.mxu0 0
    %1345 = vmatpush.bf16.msra.mxu0 0
    %1346 = vmatpush.bf16.msra.mxu0 %v1207
    %1347 = vmatpush.bf16.msra.mxu0 %v1206
    %1348 = vmatmul.bf16.gmra.mxu0 %v1338
    %v1349 = vpop.f32.mrf.mxu0
    %v1350 = vadd.f32 0.0, %v1349
    %v1351 = vpop.f32.mrf.mxu0
    %1352 = vdwg.mxu0
    %v1354 = vrot.slane %v1350, 1
    %v1357 = vadd.f32 %v1324, %v1350
    %v1358 = vadd.f32 %v1325, %v1354
    %v1359 = vxor.u32 %v1357, 2147483648
    %v1360 = vxor.u32 %v1358, 2147483648
    %v1361 = vmul.f32 %v1359, 1.442695
    %v1362 = vpow.pop %v1361
    %v1363 = vmul.f32 %v1360, 1.442695
    %v1364 = vpow.pop %v1363
    %v1365 = vadd.f32 %v1362, 1.0
    %v1366 = vadd.f32 %v1364, 1.0
    %v1367 = vrcp.pop %v1365
    %v1368 = vmul.f32 %v1365, %v1367
    %v1369 = vsub.f32 1.0, %v1368
    %v1370 = vmul.f32 %v1367, %v1369
    %v1371 = vadd.f32 %v1367, %v1370
    %vm1372 = vweird.f32 %v1365
    %vm1373 = vweird.f32 %v1367
    %vm1374 = vmor %vm1372, %vm1373
    %v1375 = vsel %vm1374, %v1367, %v1371
    %v1376 = vand.u32 2147483647, %v1365
    %vm1377 = vcmp.eq.f32.partialorder %v1376, 8.507059e+37
    %v1378 = vand.u32 %v1365, 2147483648
    %v1379 = vor.u32 1.1754944e-38, %v1378
    %v1380 = vsel %vm1377, %v1379, %v1375
    %v1381 = vmul.f32 1.0, %v1380
    %v1382 = vrcp.pop %v1366
    %v1383 = vmul.f32 %v1366, %v1382
    %v1384 = vsub.f32 1.0, %v1383
    %v1385 = vmul.f32 %v1382, %v1384
    %v1386 = vadd.f32 %v1382, %v1385
    %vm1387 = vweird.f32 %v1366
    %vm1388 = vweird.f32 %v1382
    %vm1389 = vmor %vm1387, %vm1388
    %v1390 = vsel %vm1389, %v1382, %v1386
    %v1391 = vand.u32 2147483647, %v1366
    %vm1392 = vcmp.eq.f32.partialorder %v1391, 8.507059e+37
    %v1393 = vand.u32 %v1366, 2147483648
    %v1394 = vor.u32 1.1754944e-38, %v1393
    %v1395 = vsel %vm1392, %v1394, %v1390
    %v1396 = vmul.f32 1.0, %v1395
    %v1397 = vtanh.pop %v1357
    %v1398 = vtanh.pop %v1358
    %v1399 = vmul.f32 %v1381, %v1300
    %v1400 = vmul.f32 %v1396, %v1301
    %1403 = vrot.lane.b32.xlu0 %v1397, 64
    %v1404 = vpop.permute.xlu0 %1403
    %1405 = vrot.lane.b32.xlu0 %v1398, 64
    %v1406 = vpop.permute.xlu0 %1405
    %v1409 = vmul.f32 %v1381, %v1404
    %v1410 = vmul.f32 %v1396, %v1406
    %1413 = vrot.lane.b32.xlu0 %v1409, 32
    %v1414 = vpop.permute.xlu0 %1413
    %1415 = vrot.lane.b32.xlu0 %v1410, 32
    %v1416 = vpop.permute.xlu0 %1415
    %v1419 = vadd.f32 %v1399, %v1414
    %v1420 = vadd.f32 %v1400, %v1416
    %v1421 = vtanh.pop %v1419
    %v1422 = vtanh.pop %v1420
    %1425 = vrot.lane.b32.xlu0 %v1421, 64
    %v1426 = vpop.permute.xlu0 %1425
    %1427 = vrot.lane.b32.xlu0 %v1422, 64
    %v1428 = vpop.permute.xlu0 %1427
    %v1431 = vmul.f32 %v1381, %v1426
    %v1432 = vmul.f32 %v1396, %v1428
    %1435 = vrot.lane.b32.xlu0 %v1431, 32
    %v1436 = vpop.permute.xlu0 %1435
    %1437 = vrot.lane.b32.xlu0 %v1432, 32
    %v1438 = vpop.permute.xlu0 %1437
    %1441 = vst.msk [vmem:[#allocation5 + $0x1] sm:$0x1] %vm292, %v1436
    %1442 = vst.msk [vmem:[#allocation5 + $0x9] sm:$0x1] %vm292, %v1438
    %v1443 = vld [vmem:[#allocation4 + $0x2] sm:$0x1]
    %v1444 = vld [vmem:[#allocation4 + $0xa] sm:$0x1]
    %v1445 = vpack.c.bf16 %v1431, %v1431
    %v1446 = vpack.c.bf16 %v1432, %v1432
    %v1449 = vunpack.c.l.b16 %v1445
    %v1450 = vunpack.c.l.b16 %v1446
    %v1451 = vrot.slane %v1450, 7
    %v1452 = vsel %vm304, %v1451, %v1449
    %v1453 = vpack.c.b16 %v1452, %v1452
    %1454 = vrot.lane.b32.xlu0 %v1453, 32
    %v1455 = vpop.permute.xlu0 %1454
    %v1457 = vsel %vm139, %v1455, 0
    %1459 = vmatpush.bf16.msra.mxu0 0
    %1460 = vmatpush.bf16.msra.mxu0 0
    %1461 = vmatpush.bf16.msra.mxu0 0
    %1462 = vmatpush.bf16.msra.mxu0 0
    %1463 = vmatpush.bf16.msra.mxu0 0
    %1464 = vmatpush.bf16.msra.mxu0 0
    %1465 = vmatpush.bf16.msra.mxu0 %v1207
    %1466 = vmatpush.bf16.msra.mxu0 %v1206
    %1467 = vmatmul.bf16.gmra.mxu0 %v1457
    %v1468 = vpop.f32.mrf.mxu0
    %v1469 = vadd.f32 0.0, %v1468
    %v1470 = vpop.f32.mrf.mxu0
    %1471 = vdwg.mxu0
    %v1473 = vrot.slane %v1469, 1
    %v1476 = vadd.f32 %v1443, %v1469
    %v1477 = vadd.f32 %v1444, %v1473
    %v1478 = vxor.u32 %v1476, 2147483648
    %v1479 = vxor.u32 %v1477, 2147483648
    %v1480 = vmul.f32 %v1478, 1.442695
    %v1481 = vpow.pop %v1480
    %v1482 = vmul.f32 %v1479, 1.442695
    %v1483 = vpow.pop %v1482
    %v1484 = vadd.f32 %v1481, 1.0
    %v1485 = vadd.f32 %v1483, 1.0
    %v1486 = vrcp.pop %v1484
    %v1487 = vmul.f32 %v1484, %v1486
    %v1488 = vsub.f32 1.0, %v1487
    %v1489 = vmul.f32 %v1486, %v1488
    %v1490 = vadd.f32 %v1486, %v1489
    %vm1491 = vweird.f32 %v1484
    %vm1492 = vweird.f32 %v1486
    %vm1493 = vmor %vm1491, %vm1492
    %v1494 = vsel %vm1493, %v1486, %v1490
    %v1495 = vand.u32 2147483647, %v1484
    %vm1496 = vcmp.eq.f32.partialorder %v1495, 8.507059e+37
    %v1497 = vand.u32 %v1484, 2147483648
    %v1498 = vor.u32 1.1754944e-38, %v1497
    %v1499 = vsel %vm1496, %v1498, %v1494
    %v1500 = vmul.f32 1.0, %v1499
    %v1501 = vrcp.pop %v1485
    %v1502 = vmul.f32 %v1485, %v1501
    %v1503 = vsub.f32 1.0, %v1502
    %v1504 = vmul.f32 %v1501, %v1503
    %v1505 = vadd.f32 %v1501, %v1504
    %vm1506 = vweird.f32 %v1485
    %vm1507 = vweird.f32 %v1501
    %vm1508 = vmor %vm1506, %vm1507
    %v1509 = vsel %vm1508, %v1501, %v1505
    %v1510 = vand.u32 2147483647, %v1485
    %vm1511 = vcmp.eq.f32.partialorder %v1510, 8.507059e+37
    %v1512 = vand.u32 %v1485, 2147483648
    %v1513 = vor.u32 1.1754944e-38, %v1512
    %v1514 = vsel %vm1511, %v1513, %v1509
    %v1515 = vmul.f32 1.0, %v1514
    %v1516 = vtanh.pop %v1476
    %v1517 = vtanh.pop %v1477
    %v1518 = vmul.f32 %v1500, %v1419
    %v1519 = vmul.f32 %v1515, %v1420
    %1522 = vrot.lane.b32.xlu0 %v1516, 64
    %v1523 = vpop.permute.xlu0 %1522
    %1524 = vrot.lane.b32.xlu0 %v1517, 64
    %v1525 = vpop.permute.xlu0 %1524
    %v1528 = vmul.f32 %v1500, %v1523
    %v1529 = vmul.f32 %v1515, %v1525
    %1532 = vrot.lane.b32.xlu0 %v1528, 32
    %v1533 = vpop.permute.xlu0 %1532
    %1534 = vrot.lane.b32.xlu0 %v1529, 32
    %v1535 = vpop.permute.xlu0 %1534
    %v1538 = vadd.f32 %v1518, %v1533
    %v1539 = vadd.f32 %v1519, %v1535
    %v1540 = vtanh.pop %v1538
    %v1541 = vtanh.pop %v1539
    %1544 = vrot.lane.b32.xlu0 %v1540, 64
    %v1545 = vpop.permute.xlu0 %1544
    %1546 = vrot.lane.b32.xlu0 %v1541, 64
    %v1547 = vpop.permute.xlu0 %1546
    %v1550 = vmul.f32 %v1500, %v1545
    %v1551 = vmul.f32 %v1515, %v1547
    %1554 = vrot.lane.b32.xlu0 %v1550, 32
    %v1555 = vpop.permute.xlu0 %1554
    %1556 = vrot.lane.b32.xlu0 %v1551, 32
    %v1557 = vpop.permute.xlu0 %1556
    %1560 = vst.msk [vmem:[#allocation5 + $0x2] sm:$0x1] %vm292, %v1555
    %1561 = vst.msk [vmem:[#allocation5 + $0xa] sm:$0x1] %vm292, %v1557
    %v1562 = vld [vmem:[#allocation4 + $0x3] sm:$0x1]
    %v1563 = vld [vmem:[#allocation4 + $0xb] sm:$0x1]
    %v1564 = vpack.c.bf16 %v1550, %v1550
    %v1565 = vpack.c.bf16 %v1551, %v1551
    %v1568 = vunpack.c.l.b16 %v1564
    %v1569 = vunpack.c.l.b16 %v1565
    %v1570 = vrot.slane %v1569, 7
    %v1571 = vsel %vm304, %v1570, %v1568
    %v1572 = vpack.c.b16 %v1571, %v1571
    %1573 = vrot.lane.b32.xlu0 %v1572, 32
    %v1574 = vpop.permute.xlu0 %1573
    %v1576 = vsel %vm139, %v1574, 0
    %1578 = vmatpush.bf16.msra.mxu0 0
    %1579 = vmatpush.bf16.msra.mxu0 0
    %1580 = vmatpush.bf16.msra.mxu0 0
    %1581 = vmatpush.bf16.msra.mxu0 0
    %1582 = vmatpush.bf16.msra.mxu0 0
    %1583 = vmatpush.bf16.msra.mxu0 0
    %1584 = vmatpush.bf16.msra.mxu0 %v1207
    %1585 = vmatpush.bf16.msra.mxu0 %v1206
    %1586 = vmatmul.bf16.gmra.mxu0 %v1576
    %v1587 = vpop.f32.mrf.mxu0
    %v1588 = vadd.f32 0.0, %v1587
    %v1589 = vpop.f32.mrf.mxu0
    %1590 = vdwg.mxu0
    %v1592 = vrot.slane %v1588, 1
    %v1595 = vadd.f32 %v1562, %v1588
    %v1596 = vadd.f32 %v1563, %v1592
    %v1597 = vxor.u32 %v1595, 2147483648
    %v1598 = vxor.u32 %v1596, 2147483648
    %v1599 = vmul.f32 %v1597, 1.442695
    %v1600 = vpow.pop %v1599
    %v1601 = vmul.f32 %v1598, 1.442695
    %v1602 = vpow.pop %v1601
    %v1603 = vadd.f32 %v1600, 1.0
    %v1604 = vadd.f32 %v1602, 1.0
    %v1605 = vrcp.pop %v1603
    %v1606 = vmul.f32 %v1603, %v1605
    %v1607 = vsub.f32 1.0, %v1606
    %v1608 = vmul.f32 %v1605, %v1607
    %v1609 = vadd.f32 %v1605, %v1608
    %vm1610 = vweird.f32 %v1603
    %vm1611 = vweird.f32 %v1605
    %vm1612 = vmor %vm1610, %vm1611
    %v1613 = vsel %vm1612, %v1605, %v1609
    %v1614 = vand.u32 2147483647, %v1603
    %vm1615 = vcmp.eq.f32.partialorder %v1614, 8.507059e+37
    %v1616 = vand.u32 %v1603, 2147483648
    %v1617 = vor.u32 1.1754944e-38, %v1616
    %v1618 = vsel %vm1615, %v1617, %v1613
    %v1619 = vmul.f32 1.0, %v1618
    %v1620 = vrcp.pop %v1604
    %v1621 = vmul.f32 %v1604, %v1620
    %v1622 = vsub.f32 1.0, %v1621
    %v1623 = vmul.f32 %v1620, %v1622
    %v1624 = vadd.f32 %v1620, %v1623
    %vm1625 = vweird.f32 %v1604
    %vm1626 = vweird.f32 %v1620
    %vm1627 = vmor %vm1625, %vm1626
    %v1628 = vsel %vm1627, %v1620, %v1624
    %v1629 = vand.u32 2147483647, %v1604
    %vm1630 = vcmp.eq.f32.partialorder %v1629, 8.507059e+37
    %v1631 = vand.u32 %v1604, 2147483648
    %v1632 = vor.u32 1.1754944e-38, %v1631
    %v1633 = vsel %vm1630, %v1632, %v1628
    %v1634 = vmul.f32 1.0, %v1633
    %v1635 = vtanh.pop %v1595
    %v1636 = vtanh.pop %v1596
    %v1637 = vmul.f32 %v1619, %v1538
    %v1638 = vmul.f32 %v1634, %v1539
    %1641 = vrot.lane.b32.xlu0 %v1635, 64
    %v1642 = vpop.permute.xlu0 %1641
    %1643 = vrot.lane.b32.xlu0 %v1636, 64
    %v1644 = vpop.permute.xlu0 %1643
    %v1647 = vmul.f32 %v1619, %v1642
    %v1648 = vmul.f32 %v1634, %v1644
    %1651 = vrot.lane.b32.xlu0 %v1647, 32
    %v1652 = vpop.permute.xlu0 %1651
    %1653 = vrot.lane.b32.xlu0 %v1648, 32
    %v1654 = vpop.permute.xlu0 %1653
    %v1657 = vadd.f32 %v1637, %v1652
    %v1658 = vadd.f32 %v1638, %v1654
    %v1659 = vtanh.pop %v1657
    %v1660 = vtanh.pop %v1658
    %1663 = vrot.lane.b32.xlu0 %v1659, 64
    %v1664 = vpop.permute.xlu0 %1663
    %1665 = vrot.lane.b32.xlu0 %v1660, 64
    %v1666 = vpop.permute.xlu0 %1665
    %v1669 = vmul.f32 %v1619, %v1664
    %v1670 = vmul.f32 %v1634, %v1666
    %1673 = vrot.lane.b32.xlu0 %v1669, 32
    %v1674 = vpop.permute.xlu0 %1673
    %1675 = vrot.lane.b32.xlu0 %v1670, 32
    %v1676 = vpop.permute.xlu0 %1675
    %1679 = vst.msk [vmem:[#allocation5 + $0x3] sm:$0x1] %vm292, %v1674
    %1680 = vst.msk [vmem:[#allocation5 + $0xb] sm:$0x1] %vm292, %v1676
    %v1681 = vld [vmem:[#allocation4 + $0x4] sm:$0x1]
    %v1682 = vld [vmem:[#allocation4 + $0xc] sm:$0x1]
    %v1683 = vpack.c.bf16 %v1669, %v1669
    %v1684 = vpack.c.bf16 %v1670, %v1670
    %v1687 = vunpack.c.l.b16 %v1683
    %v1688 = vunpack.c.l.b16 %v1684
    %v1689 = vrot.slane %v1688, 7
    %v1690 = vsel %vm304, %v1689, %v1687
    %v1691 = vpack.c.b16 %v1690, %v1690
    %1692 = vrot.lane.b32.xlu0 %v1691, 32
    %v1693 = vpop.permute.xlu0 %1692
    %v1695 = vsel %vm139, %v1693, 0
    %1697 = vmatpush.bf16.msra.mxu0 0
    %1698 = vmatpush.bf16.msra.mxu0 0
    %1699 = vmatpush.bf16.msra.mxu0 0
    %1700 = vmatpush.bf16.msra.mxu0 0
    %1701 = vmatpush.bf16.msra.mxu0 0
    %1702 = vmatpush.bf16.msra.mxu0 0
    %1703 = vmatpush.bf16.msra.mxu0 %v1207
    %1704 = vmatpush.bf16.msra.mxu0 %v1206
    %1705 = vmatmul.bf16.gmra.mxu0 %v1695
    %v1706 = vpop.f32.mrf.mxu0
    %v1707 = vadd.f32 0.0, %v1706
    %v1708 = vpop.f32.mrf.mxu0
    %1709 = vdwg.mxu0
    %v1711 = vrot.slane %v1707, 1
    %v1714 = vadd.f32 %v1681, %v1707
    %v1715 = vadd.f32 %v1682, %v1711
    %v1716 = vxor.u32 %v1714, 2147483648
    %v1717 = vxor.u32 %v1715, 2147483648
    %v1718 = vmul.f32 %v1716, 1.442695
    %v1719 = vpow.pop %v1718
    %v1720 = vmul.f32 %v1717, 1.442695
    %v1721 = vpow.pop %v1720
    %v1722 = vadd.f32 %v1719, 1.0
    %v1723 = vadd.f32 %v1721, 1.0
    %v1724 = vrcp.pop %v1722
    %v1725 = vmul.f32 %v1722, %v1724
    %v1726 = vsub.f32 1.0, %v1725
    %v1727 = vmul.f32 %v1724, %v1726
    %v1728 = vadd.f32 %v1724, %v1727
    %vm1729 = vweird.f32 %v1722
    %vm1730 = vweird.f32 %v1724
    %vm1731 = vmor %vm1729, %vm1730
    %v1732 = vsel %vm1731, %v1724, %v1728
    %v1733 = vand.u32 2147483647, %v1722
    %vm1734 = vcmp.eq.f32.partialorder %v1733, 8.507059e+37
    %v1735 = vand.u32 %v1722, 2147483648
    %v1736 = vor.u32 1.1754944e-38, %v1735
    %v1737 = vsel %vm1734, %v1736, %v1732
    %v1738 = vmul.f32 1.0, %v1737
    %v1739 = vrcp.pop %v1723
    %v1740 = vmul.f32 %v1723, %v1739
    %v1741 = vsub.f32 1.0, %v1740
    %v1742 = vmul.f32 %v1739, %v1741
    %v1743 = vadd.f32 %v1739, %v1742
    %vm1744 = vweird.f32 %v1723
    %vm1745 = vweird.f32 %v1739
    %vm1746 = vmor %vm1744, %vm1745
    %v1747 = vsel %vm1746, %v1739, %v1743
    %v1748 = vand.u32 2147483647, %v1723
    %vm1749 = vcmp.eq.f32.partialorder %v1748, 8.507059e+37
    %v1750 = vand.u32 %v1723, 2147483648
    %v1751 = vor.u32 1.1754944e-38, %v1750
    %v1752 = vsel %vm1749, %v1751, %v1747
    %v1753 = vmul.f32 1.0, %v1752
    %v1754 = vtanh.pop %v1714
    %v1755 = vtanh.pop %v1715
    %v1756 = vmul.f32 %v1738, %v1657
    %v1757 = vmul.f32 %v1753, %v1658
    %1760 = vrot.lane.b32.xlu0 %v1754, 64
    %v1761 = vpop.permute.xlu0 %1760
    %1762 = vrot.lane.b32.xlu0 %v1755, 64
    %v1763 = vpop.permute.xlu0 %1762
    %v1766 = vmul.f32 %v1738, %v1761
    %v1767 = vmul.f32 %v1753, %v1763
    %1770 = vrot.lane.b32.xlu0 %v1766, 32
    %v1771 = vpop.permute.xlu0 %1770
    %1772 = vrot.lane.b32.xlu0 %v1767, 32
    %v1773 = vpop.permute.xlu0 %1772
    %v1776 = vadd.f32 %v1756, %v1771
    %v1777 = vadd.f32 %v1757, %v1773
    %v1778 = vtanh.pop %v1776
    %v1779 = vtanh.pop %v1777
    %1782 = vrot.lane.b32.xlu0 %v1778, 64
    %v1783 = vpop.permute.xlu0 %1782
    %1784 = vrot.lane.b32.xlu0 %v1779, 64
    %v1785 = vpop.permute.xlu0 %1784
    %v1788 = vmul.f32 %v1738, %v1783
    %v1789 = vmul.f32 %v1753, %v1785
    %1792 = vrot.lane.b32.xlu0 %v1788, 32
    %v1793 = vpop.permute.xlu0 %1792
    %1794 = vrot.lane.b32.xlu0 %v1789, 32
    %v1795 = vpop.permute.xlu0 %1794
    %1798 = vst.msk [vmem:[#allocation5 + $0x4] sm:$0x1] %vm292, %v1793
    %1799 = vst.msk [vmem:[#allocation5 + $0xc] sm:$0x1] %vm292, %v1795
    %v1800 = vld [vmem:[#allocation4 + $0x5] sm:$0x1]
    %v1801 = vld [vmem:[#allocation4 + $0xd] sm:$0x1]
    %v1802 = vpack.c.bf16 %v1788, %v1788
    %v1803 = vpack.c.bf16 %v1789, %v1789
    %v1806 = vunpack.c.l.b16 %v1802
    %v1807 = vunpack.c.l.b16 %v1803
    %v1808 = vrot.slane %v1807, 7
    %v1809 = vsel %vm304, %v1808, %v1806
    %v1810 = vpack.c.b16 %v1809, %v1809
    %1811 = vrot.lane.b32.xlu0 %v1810, 32
    %v1812 = vpop.permute.xlu0 %1811
    %v1814 = vsel %vm139, %v1812, 0
    %1816 = vmatpush.bf16.msra.mxu0 0
    %1817 = vmatpush.bf16.msra.mxu0 0
    %1818 = vmatpush.bf16.msra.mxu0 0
    %1819 = vmatpush.bf16.msra.mxu0 0
    %1820 = vmatpush.bf16.msra.mxu0 0
    %1821 = vmatpush.bf16.msra.mxu0 0
    %1822 = vmatpush.bf16.msra.mxu0 %v1207
    %1823 = vmatpush.bf16.msra.mxu0 %v1206
    %1824 = vmatmul.bf16.gmra.mxu0 %v1814
    %v1825 = vpop.f32.mrf.mxu0
    %v1826 = vadd.f32 0.0, %v1825
    %v1827 = vpop.f32.mrf.mxu0
    %1828 = vdwg.mxu0
    %v1830 = vrot.slane %v1826, 1
    %v1833 = vadd.f32 %v1800, %v1826
    %v1834 = vadd.f32 %v1801, %v1830
    %v1835 = vxor.u32 %v1833, 2147483648
    %v1836 = vxor.u32 %v1834, 2147483648
    %v1837 = vmul.f32 %v1835, 1.442695
    %v1838 = vpow.pop %v1837
    %v1839 = vmul.f32 %v1836, 1.442695
    %v1840 = vpow.pop %v1839
    %v1841 = vadd.f32 %v1838, 1.0
    %v1842 = vadd.f32 %v1840, 1.0
    %v1843 = vrcp.pop %v1841
    %v1844 = vmul.f32 %v1841, %v1843
    %v1845 = vsub.f32 1.0, %v1844
    %v1846 = vmul.f32 %v1843, %v1845
    %v1847 = vadd.f32 %v1843, %v1846
    %vm1848 = vweird.f32 %v1841
    %vm1849 = vweird.f32 %v1843
    %vm1850 = vmor %vm1848, %vm1849
    %v1851 = vsel %vm1850, %v1843, %v1847
    %v1852 = vand.u32 2147483647, %v1841
    %vm1853 = vcmp.eq.f32.partialorder %v1852, 8.507059e+37
    %v1854 = vand.u32 %v1841, 2147483648
    %v1855 = vor.u32 1.1754944e-38, %v1854
    %v1856 = vsel %vm1853, %v1855, %v1851
    %v1857 = vmul.f32 1.0, %v1856
    %v1858 = vrcp.pop %v1842
    %v1859 = vmul.f32 %v1842, %v1858
    %v1860 = vsub.f32 1.0, %v1859
    %v1861 = vmul.f32 %v1858, %v1860
    %v1862 = vadd.f32 %v1858, %v1861
    %vm1863 = vweird.f32 %v1842
    %vm1864 = vweird.f32 %v1858
    %vm1865 = vmor %vm1863, %vm1864
    %v1866 = vsel %vm1865, %v1858, %v1862
    %v1867 = vand.u32 2147483647, %v1842
    %vm1868 = vcmp.eq.f32.partialorder %v1867, 8.507059e+37
    %v1869 = vand.u32 %v1842, 2147483648
    %v1870 = vor.u32 1.1754944e-38, %v1869
    %v1871 = vsel %vm1868, %v1870, %v1866
    %v1872 = vmul.f32 1.0, %v1871
    %v1873 = vtanh.pop %v1833
    %v1874 = vtanh.pop %v1834
    %v1875 = vmul.f32 %v1857, %v1776
    %v1876 = vmul.f32 %v1872, %v1777
    %1879 = vrot.lane.b32.xlu0 %v1873, 64
    %v1880 = vpop.permute.xlu0 %1879
    %1881 = vrot.lane.b32.xlu0 %v1874, 64
    %v1882 = vpop.permute.xlu0 %1881
    %v1885 = vmul.f32 %v1857, %v1880
    %v1886 = vmul.f32 %v1872, %v1882
    %1889 = vrot.lane.b32.xlu0 %v1885, 32
    %v1890 = vpop.permute.xlu0 %1889
    %1891 = vrot.lane.b32.xlu0 %v1886, 32
    %v1892 = vpop.permute.xlu0 %1891
    %v1895 = vadd.f32 %v1875, %v1890
    %v1896 = vadd.f32 %v1876, %v1892
    %v1897 = vtanh.pop %v1895
    %v1898 = vtanh.pop %v1896
    %1901 = vrot.lane.b32.xlu0 %v1897, 64
    %v1902 = vpop.permute.xlu0 %1901
    %1903 = vrot.lane.b32.xlu0 %v1898, 64
    %v1904 = vpop.permute.xlu0 %1903
    %v1907 = vmul.f32 %v1857, %v1902
    %v1908 = vmul.f32 %v1872, %v1904
    %1911 = vrot.lane.b32.xlu0 %v1907, 32
    %v1912 = vpop.permute.xlu0 %1911
    %1913 = vrot.lane.b32.xlu0 %v1908, 32
    %v1914 = vpop.permute.xlu0 %1913
    %1917 = vst.msk [vmem:[#allocation5 + $0x5] sm:$0x1] %vm292, %v1912
    %1918 = vst.msk [vmem:[#allocation5 + $0xd] sm:$0x1] %vm292, %v1914
    %v1919 = vld [vmem:[#allocation4 + $0x6] sm:$0x1]
    %v1920 = vld [vmem:[#allocation4 + $0xe] sm:$0x1]
    %v1921 = vpack.c.bf16 %v1907, %v1907
    %v1922 = vpack.c.bf16 %v1908, %v1908
    %v1925 = vunpack.c.l.b16 %v1921
    %v1926 = vunpack.c.l.b16 %v1922
    %v1927 = vrot.slane %v1926, 7
    %v1928 = vsel %vm304, %v1927, %v1925
    %v1929 = vpack.c.b16 %v1928, %v1928
    %1930 = vrot.lane.b32.xlu0 %v1929, 32
    %v1931 = vpop.permute.xlu0 %1930
    %v1933 = vsel %vm139, %v1931, 0
    %1935 = vmatpush.bf16.msra.mxu0 0
    %1936 = vmatpush.bf16.msra.mxu0 0
    %1937 = vmatpush.bf16.msra.mxu0 0
    %1938 = vmatpush.bf16.msra.mxu0 0
    %1939 = vmatpush.bf16.msra.mxu0 0
    %1940 = vmatpush.bf16.msra.mxu0 0
    %1941 = vmatpush.bf16.msra.mxu0 %v1207
    %1942 = vmatpush.bf16.msra.mxu0 %v1206
    %1943 = vmatmul.bf16.gmra.mxu0 %v1933
    %v1944 = vpop.f32.mrf.mxu0
    %v1945 = vadd.f32 0.0, %v1944
    %v1946 = vpop.f32.mrf.mxu0
    %1947 = vdwg.mxu0
    %v1949 = vrot.slane %v1945, 1
    %v1952 = vadd.f32 %v1919, %v1945
    %v1953 = vadd.f32 %v1920, %v1949
    %v1954 = vxor.u32 %v1952, 2147483648
    %v1955 = vxor.u32 %v1953, 2147483648
    %v1956 = vmul.f32 %v1954, 1.442695
    %v1957 = vpow.pop %v1956
    %v1958 = vmul.f32 %v1955, 1.442695
    %v1959 = vpow.pop %v1958
    %v1960 = vadd.f32 %v1957, 1.0
    %v1961 = vadd.f32 %v1959, 1.0
    %v1962 = vrcp.pop %v1960
    %v1963 = vmul.f32 %v1960, %v1962
    %v1964 = vsub.f32 1.0, %v1963
    %v1965 = vmul.f32 %v1962, %v1964
    %v1966 = vadd.f32 %v1962, %v1965
    %vm1967 = vweird.f32 %v1960
    %vm1968 = vweird.f32 %v1962
    %vm1969 = vmor %vm1967, %vm1968
    %v1970 = vsel %vm1969, %v1962, %v1966
    %v1971 = vand.u32 2147483647, %v1960
    %vm1972 = vcmp.eq.f32.partialorder %v1971, 8.507059e+37
    %v1973 = vand.u32 %v1960, 2147483648
    %v1974 = vor.u32 1.1754944e-38, %v1973
    %v1975 = vsel %vm1972, %v1974, %v1970
    %v1976 = vmul.f32 1.0, %v1975
    %v1977 = vrcp.pop %v1961
    %v1978 = vmul.f32 %v1961, %v1977
    %v1979 = vsub.f32 1.0, %v1978
    %v1980 = vmul.f32 %v1977, %v1979
    %v1981 = vadd.f32 %v1977, %v1980
    %vm1982 = vweird.f32 %v1961
    %vm1983 = vweird.f32 %v1977
    %vm1984 = vmor %vm1982, %vm1983
    %v1985 = vsel %vm1984, %v1977, %v1981
    %v1986 = vand.u32 2147483647, %v1961
    %vm1987 = vcmp.eq.f32.partialorder %v1986, 8.507059e+37
    %v1988 = vand.u32 %v1961, 2147483648
    %v1989 = vor.u32 1.1754944e-38, %v1988
    %v1990 = vsel %vm1987, %v1989, %v1985
    %v1991 = vmul.f32 1.0, %v1990
    %v1992 = vtanh.pop %v1952
    %v1993 = vtanh.pop %v1953
    %v1994 = vmul.f32 %v1976, %v1895
    %v1995 = vmul.f32 %v1991, %v1896
    %1998 = vrot.lane.b32.xlu0 %v1992, 64
    %v1999 = vpop.permute.xlu0 %1998
    %2000 = vrot.lane.b32.xlu0 %v1993, 64
    %v2001 = vpop.permute.xlu0 %2000
    %v2004 = vmul.f32 %v1976, %v1999
    %v2005 = vmul.f32 %v1991, %v2001
    %2008 = vrot.lane.b32.xlu0 %v2004, 32
    %v2009 = vpop.permute.xlu0 %2008
    %2010 = vrot.lane.b32.xlu0 %v2005, 32
    %v2011 = vpop.permute.xlu0 %2010
    %v2014 = vadd.f32 %v1994, %v2009
    %v2015 = vadd.f32 %v1995, %v2011
    %v2016 = vtanh.pop %v2014
    %v2017 = vtanh.pop %v2015
    %2020 = vrot.lane.b32.xlu0 %v2016, 64
    %v2021 = vpop.permute.xlu0 %2020
    %2022 = vrot.lane.b32.xlu0 %v2017, 64
    %v2023 = vpop.permute.xlu0 %2022
    %v2026 = vmul.f32 %v1976, %v2021
    %v2027 = vmul.f32 %v1991, %v2023
    %2030 = vrot.lane.b32.xlu0 %v2026, 32
    %v2031 = vpop.permute.xlu0 %2030
    %2032 = vrot.lane.b32.xlu0 %v2027, 32
    %v2033 = vpop.permute.xlu0 %2032
    %2036 = vst.msk [vmem:[#allocation5 + $0x6] sm:$0x1] %vm292, %v2031
    %2037 = vst.msk [vmem:[#allocation5 + $0xe] sm:$0x1] %vm292, %v2033
    %v2038 = vld [vmem:[#allocation4 + $0x7] sm:$0x1]
    %v2039 = vld [vmem:[#allocation4 + $0xf] sm:$0x1]
    %v2040 = vpack.c.bf16 %v2026, %v2026
    %v2041 = vpack.c.bf16 %v2027, %v2027
    %v2044 = vunpack.c.l.b16 %v2040
    %v2045 = vunpack.c.l.b16 %v2041
    %v2046 = vrot.slane %v2045, 7
    %v2047 = vsel %vm304, %v2046, %v2044
    %v2048 = vpack.c.b16 %v2047, %v2047
    %2049 = vrot.lane.b32.xlu0 %v2048, 32
    %v2050 = vpop.permute.xlu0 %2049
    %v2052 = vsel %vm139, %v2050, 0
    %2054 = vmatpush.bf16.msra.mxu0 0
    %2055 = vmatpush.bf16.msra.mxu0 0
    %2056 = vmatpush.bf16.msra.mxu0 0
    %2057 = vmatpush.bf16.msra.mxu0 0
    %2058 = vmatpush.bf16.msra.mxu0 0
    %2059 = vmatpush.bf16.msra.mxu0 0
    %2060 = vmatpush.bf16.msra.mxu0 %v1207
    %2061 = vmatpush.bf16.msra.mxu0 %v1206
    %2062 = vmatmul.bf16.gmra.mxu0 %v2052
    %v2063 = vpop.f32.mrf.mxu0
    %v2064 = vadd.f32 0.0, %v2063
    %v2065 = vpop.f32.mrf.mxu0
    %2066 = vdwg.mxu0
    %v2068 = vrot.slane %v2064, 1
    %v2071 = vadd.f32 %v2038, %v2064
    %v2072 = vadd.f32 %v2039, %v2068
    %v2073 = vxor.u32 %v2071, 2147483648
    %v2074 = vxor.u32 %v2072, 2147483648
    %v2075 = vmul.f32 %v2073, 1.442695
    %v2076 = vpow.pop %v2075
    %v2077 = vmul.f32 %v2074, 1.442695
    %v2078 = vpow.pop %v2077
    %v2079 = vadd.f32 %v2076, 1.0
    %v2080 = vadd.f32 %v2078, 1.0
    %v2081 = vrcp.pop %v2079
    %v2082 = vmul.f32 %v2079, %v2081
    %v2083 = vsub.f32 1.0, %v2082
    %v2084 = vmul.f32 %v2081, %v2083
    %v2085 = vadd.f32 %v2081, %v2084
    %vm2086 = vweird.f32 %v2079
    %vm2087 = vweird.f32 %v2081
    %vm2088 = vmor %vm2086, %vm2087
    %v2089 = vsel %vm2088, %v2081, %v2085
    %v2090 = vand.u32 2147483647, %v2079
    %vm2091 = vcmp.eq.f32.partialorder %v2090, 8.507059e+37
    %v2092 = vand.u32 %v2079, 2147483648
    %v2093 = vor.u32 1.1754944e-38, %v2092
    %v2094 = vsel %vm2091, %v2093, %v2089
    %v2095 = vmul.f32 1.0, %v2094
    %v2096 = vrcp.pop %v2080
    %v2097 = vmul.f32 %v2080, %v2096
    %v2098 = vsub.f32 1.0, %v2097
    %v2099 = vmul.f32 %v2096, %v2098
    %v2100 = vadd.f32 %v2096, %v2099
    %vm2101 = vweird.f32 %v2080
    %vm2102 = vweird.f32 %v2096
    %vm2103 = vmor %vm2101, %vm2102
    %v2104 = vsel %vm2103, %v2096, %v2100
    %v2105 = vand.u32 2147483647, %v2080
    %vm2106 = vcmp.eq.f32.partialorder %v2105, 8.507059e+37
    %v2107 = vand.u32 %v2080, 2147483648
    %v2108 = vor.u32 1.1754944e-38, %v2107
    %v2109 = vsel %vm2106, %v2108, %v2104
    %v2110 = vmul.f32 1.0, %v2109
    %v2111 = vtanh.pop %v2071
    %v2112 = vtanh.pop %v2072
    %v2113 = vmul.f32 %v2095, %v2014
    %v2114 = vmul.f32 %v2110, %v2015
    %2117 = vrot.lane.b32.xlu0 %v2111, 64
    %v2118 = vpop.permute.xlu0 %2117
    %2119 = vrot.lane.b32.xlu0 %v2112, 64
    %v2120 = vpop.permute.xlu0 %2119
    %v2123 = vmul.f32 %v2095, %v2118
    %v2124 = vmul.f32 %v2110, %v2120
    %2127 = vrot.lane.b32.xlu0 %v2123, 32
    %v2128 = vpop.permute.xlu0 %2127
    %2129 = vrot.lane.b32.xlu0 %v2124, 32
    %v2130 = vpop.permute.xlu0 %2129
    %v2133 = vadd.f32 %v2113, %v2128
    %v2134 = vadd.f32 %v2114, %v2130
    %v2135 = vtanh.pop %v2133
    %v2136 = vtanh.pop %v2134
    %2139 = vrot.lane.b32.xlu0 %v2135, 64
    %v2140 = vpop.permute.xlu0 %2139
    %2141 = vrot.lane.b32.xlu0 %v2136, 64
    %v2142 = vpop.permute.xlu0 %2141
    %v2145 = vmul.f32 %v2095, %v2140
    %v2146 = vmul.f32 %v2110, %v2142
    %2149 = vrot.lane.b32.xlu0 %v2145, 32
    %v2150 = vpop.permute.xlu0 %2149
    %2151 = vrot.lane.b32.xlu0 %v2146, 32
    %v2152 = vpop.permute.xlu0 %2151
    %2155 = vst.msk [vmem:[#allocation5 + $0x7] sm:$0x1] %vm292, %v2150
    %2156 = vst.msk [vmem:[#allocation5 + $0xf] sm:$0x1] %vm292, %v2152
    %v2157 = vrot.slane %v2146, 7
    %v2158 = vsel %vm304, %v2157, %v2145
    %2159 = vrot.lane.b32.xlu0 %v2158, 32
    %v2160 = vpop.permute.xlu0 %2159
    %2162 = vst.msk [vmem:[%s1191] sm:$0x3] %vm1134, %v2160
    %v2165 = vrot.slane %v2134, 7
    %v2166 = vsel %vm304, %v2165, %v2133
    %2167 = vrot.lane.b32.xlu0 %v2166, 96
    %v2168 = vpop.permute.xlu0 %2167
    %2170 = vst.msk [vmem:[%s1193] sm:$0x3] %vm1134, %v2168
    %v2171 = vld [vmem:[#allocation5] sm:$0xff]
    %v2172 = vld [vmem:[#allocation5 + $0x8] sm:$0xff]
    %2173 = vst.msk [vmem:[#allocation15] sm:$0xff] %vm139, %v2171
    %2174 = vst.msk [vmem:[#allocation15 + $0x8] sm:$0xff] %vm139, %v2172
    // Predicated region
    $region50: #{summarizer_forward.1} parent=1 // pred_check
      _
    $region51: #{summarizer_forward.1} parent=1 // pred_check_branch
      %2176 = sbr.rel (0) target = $region53
    $region52: #{summarizer_forward.1} parent=1 // pred_region
      %2178 = vsyncadd [#allocation8], 0
      %s2179 = sshll.u32 [#allocation15], 4
      %s2180 = int_to_ptr.vmem [resolvable:$true] %s2179
      %s2181 = sshll.u32 %s6, 4
      %s2182 = int_to_ptr.hbm [resolvable:$true] %s2181
      %2187 = dma.vmem_to_hbm [thread:$0]  %s2180, 256, %s2182, [#allocation8], 128, 128, 8
    $region53: #{summarizer_forward.1} parent=1 // pred_fallthru
      _
    // Predicated region
    $region54: #{summarizer_forward.1} parent=1 // pred_check
      _
    $region55: #{summarizer_forward.1} parent=1 // pred_check_branch
      %2189 = sbr.rel (0) target = $region57
    $region56: #{summarizer_forward.1} parent=1 // pred_region
      %2191 = dma.done [#allocation8], 256
    $region57: #{summarizer_forward.1} parent=1 // pred_fallthru
      _
    %2192 = vsyncpa [#allocation7], 1
    %2193 = vsyncpa [#allocation10], 1
    %2194 = vsyncpa [#allocation13], 1
    %2195 = vsyncpa [#allocation8], 1

</llo_original>
